<compile_context>
chip_gen: v7x
topology: tpu7x:2x2x1
jax: 0.10.0
libtpu: 0.0.40
codegen_flags: <defaults>
</compile_context>

<pallas_src>
import functools

import jax
import jax.numpy as jnp
from jax.experimental import pallas as pl
from jax.experimental.pallas import tpu as pltpu


def _self_attention_kernel(xq_ref, xkv_ref, wq_ref, bq_ref, wkv_ref, bkv_ref,
                           gamma_ref, o_ref, q_sc, m_sc, l_sc, acc_sc,
                           *, tk, n_valid, exp_dtype):
    """Grid = (batch, query tile [parallel], kv tile [arbitrary, last])."""
    ki = pl.program_id(2)
    cq_pad = wq_ref.shape[0]

    @pl.when(ki == 0)
    def _():
        m_sc[...] = jnp.full_like(m_sc, -jnp.inf)
        l_sc[...] = jnp.zeros_like(l_sc)
        acc_sc[...] = jnp.zeros_like(acc_sc)
        # Hoisted q projection: computed once per (batch, query tile) and reused
        # from VMEM scratch on every kv step (bf16 MXU operands, f32 accumulate).
        xq_bf = xq_ref[0].astype(jnp.bfloat16)                        # (C, tq)
        q = jnp.dot(wq_ref[...], xq_bf,
                    preferred_element_type=jnp.float32) + bq_ref[...]  # (cq_pad, tq)
        q_sc[...] = q.astype(q_sc.dtype)

    # Fused k|v projection of this kv tile (one bf16 MXU matmul). Padded rows of
    # wk/bk are zero, so they contribute nothing to the scores.
    kv = jnp.dot(wkv_ref[...], xkv_ref[0],
                 preferred_element_type=jnp.float32) + bkv_ref[...]    # (cq_pad+C, tk)
    k = kv[:cq_pad, :].astype(jnp.bfloat16)                            # (cq_pad, tk)
    v = kv[cq_pad:, :].astype(jnp.bfloat16)                            # (C, tk)

    # s[j, i] = <k_j, q_i>: kv positions on sublanes, queries on lanes, so every
    # per-query statistic stays lane-indexed (no transposes anywhere).
    s = jax.lax.dot_general(k, q_sc[...], (((0,), (0,)), ((), ())),
                            preferred_element_type=jnp.float32)        # (tk, tq)

    if n_valid is not None:  # lane-padded spatial axis: mask padded kv positions
        kv_pos = ki * tk + jax.lax.broadcasted_iota(jnp.int32, (tk, 1), 0)
        s = jnp.where(kv_pos < n_valid, s, -jnp.inf)

    m_prev = m_sc[...]                                                 # (1, tq)
    m_new = jnp.maximum(m_prev, jnp.max(s, axis=0, keepdims=True))
    alpha = jnp.exp(m_prev - m_new)                                    # (1, tq) f32
    p = jnp.exp((s - m_new).astype(exp_dtype))                         # (tk, tq)
    l_sc[...] = alpha * l_sc[...] + jnp.sum(p.astype(jnp.float32), axis=0,
                                            keepdims=True)
    acc_sc[...] = alpha * acc_sc[...] + jnp.dot(
        v, p.astype(jnp.bfloat16), preferred_element_type=jnp.float32)  # (C, tq)
    m_sc[...] = m_new

    @pl.when(ki == pl.num_programs(2) - 1)
    def _():
        out = acc_sc[...] / l_sc[...]   # exact reciprocal: runs once per q tile
        o_ref[0] = (gamma_ref[0, 0] * out + xq_ref[0]).astype(o_ref.dtype)


def _choose_tile(n, target):
    """Largest multiple of 128 dividing n (n already a multiple of 128), <= target."""
    t = max(128, (min(target, n) // 128) * 128)
    while n % t != 0:
        t -= 128
    return t


def _vmem_limit_bytes():
    """Generation-aware scoped-VMEM limit (~60% of physical, capped)."""
    cap = 128 * 1024 * 1024
    try:
        info = pltpu.get_tpu_info()
        cap = int(getattr(info, "vmem_capacity_bytes", cap))
    except Exception:
        pass
    return max(32 * 1024 * 1024, min(int(cap * 3 // 5), 100 * 1024 * 1024))


def _default_exp_dtype():
    """bf16 exp on chips with a bf16 EUP (v6e / v7x); f32 otherwise (v5e and older)."""
    try:
        kind = jax.devices()[0].device_kind.lower()
    except Exception:
        return jnp.float32
    if ("v6" in kind) or ("v7" in kind) or ("7x" in kind):
        return jnp.bfloat16
    return jnp.float32


def self_attention(x_nchw, wq, bq, wk, bk, wv, bv, gamma, *, tq=512, tk=None,
                   exp_dtype=None):
    """x_nchw: (B, C, H, W). Weights w*: (C_in, C_out); biases b*: (1, C_out);
    gamma: (1, 1). tq/tk are query / kv tile targets."""
    B, C, H, W = x_nchw.shape
    N = H * W
    Cq = wq.shape[1]

    if exp_dtype is None:
        exp_dtype = _default_exp_dtype()

    # Lane-align the spatial axis: pad N up to a multiple of 128 so all loads and
    # stores are lane-dense; padded kv positions are masked inside the kernel and
    # padded query positions are sliced off afterwards.
    n_pad = -(-N // 128) * 128
    xf = x_nchw.reshape(B, C, N)
    if n_pad != N:
        xf = jnp.pad(xf, ((0, 0), (0, 0), (0, n_pad - N)))
    xq_stream = xf                              # f32: residual add needs full precision
    xkv_stream = xf.astype(jnp.bfloat16)        # bf16: re-streamed -> halve HBM traffic

    # Prefer a large query tile (kv-stream HBM bytes scale as (N/tq) * C * N), but
    # keep >= 2 units of 'parallel' work so v7x's two TensorCores both get a share.
    tq = _choose_tile(n_pad, tq)
    while B * (n_pad // tq) < 2 and tq > 128:
        tq = _choose_tile(n_pad, tq // 2)
    # Collapse the kv grid axis entirely when the full kv tile plus its (tk, tq)
    # score tile comfortably fit VMEM; otherwise cap tk to limit vreg pressure.
    if tk is None:
        full_kv_bytes = C * n_pad * 2 + n_pad * tq * 4
        tk = n_pad if full_kv_bytes <= 8 * 1024 * 1024 else 256
    tk = _choose_tile(n_pad, tk)

    # Pack projection weights (C_out, C_in) in bf16; pad the tiny q/k channel dim
    # up to a sublane multiple of 8 with zero weight AND zero bias (no-op padding).
    cq_pad = max(8, -(-Cq // 8) * 8)

    def pad_rows(a, rows):
        return jnp.pad(a, ((0, rows - a.shape[0]), (0, 0)))

    wq_t = pad_rows(wq.T, cq_pad).astype(jnp.bfloat16)                       # (cq_pad, C)
    bq_t = pad_rows(bq.T, cq_pad).astype(jnp.float32)                        # (cq_pad, 1)
    wkv_t = jnp.concatenate([pad_rows(wk.T, cq_pad), wv.T],
                            axis=0).astype(jnp.bfloat16)                     # (cq_pad+C, C)
    bkv_t = jnp.concatenate([pad_rows(bk.T, cq_pad), bv.T],
                            axis=0).astype(jnp.float32)                      # (cq_pad+C, 1)
    gamma_smem = gamma.reshape(1, 1).astype(jnp.float32)

    grid = (B, n_pad // tq, n_pad // tk)
    full = lambda shape: pl.BlockSpec(shape, lambda b, qi, ki: (0,) * len(shape))

    kernel = functools.partial(
        _self_attention_kernel,
        tk=tk,
        n_valid=(N if n_pad != N else None),
        exp_dtype=exp_dtype,
    )

    out_flat = pl.pallas_call(
        kernel,
        out_shape=jax.ShapeDtypeStruct((B, C, n_pad), x_nchw.dtype),
        grid_spec=pltpu.PrefetchScalarGridSpec(
            num_scalar_prefetch=0,
            grid=grid,
            in_specs=[
                pl.BlockSpec((1, C, tq), lambda b, qi, ki: (b, 0, qi)),   # x query tile (f32)
                pl.BlockSpec((1, C, tk), lambda b, qi, ki: (b, 0, ki)),   # x kv tile (bf16)
                full((cq_pad, C)), full((cq_pad, 1)),                     # wq^T, bq (padded)
                full((cq_pad + C, C)), full((cq_pad + C, 1)),             # [wk;wv]^T, [bk;bv]
                pl.BlockSpec(memory_space=pltpu.MemorySpace.SMEM),        # gamma (scalar)
            ],
            out_specs=pl.BlockSpec((1, C, tq), lambda b, qi, ki: (b, 0, qi)),
            scratch_shapes=[
                pltpu.VMEM((cq_pad, tq), jnp.bfloat16),  # hoisted q projection
                pltpu.VMEM((1, tq), jnp.float32),        # running max m
                pltpu.VMEM((1, tq), jnp.float32),        # running sum l
                pltpu.VMEM((C, tq), jnp.float32),        # output accumulator
            ],
        ),
        compiler_params=pltpu.CompilerParams(
            dimension_semantics=("parallel", "parallel", "arbitrary"),
            vmem_limit_bytes=_vmem_limit_bytes(),
        ),
    )(xq_stream, xkv_stream, wq_t, bq_t, wkv_t, bkv_t, gamma_smem)

    if n_pad != N:
        out_flat = out_flat[:, :, :N]
    return out_flat.reshape(B, C, H, W)


def self_attention_ref(x_nchw, wq, bq, wk, bk, wv, bv, gamma):
    """Pure-JAX f32 reference mirroring the PyTorch forward exactly."""
    B, C, H, W = x_nchw.shape
    N = H * W
    xf = x_nchw.reshape(B, C, N)                                        # (B, C, N)
    q = jnp.einsum('bcn,cd->bnd', xf, wq) + bq                          # (B, N, Cq)
    k = jnp.einsum('bcn,cd->bdn', xf, wk) + bk.T                        # (B, Cq, N)
    attn = jax.nn.softmax(jnp.einsum('bnd,bdm->bnm', q, k), axis=-1)    # (B, N, N)
    v = jnp.einsum('bcn,cd->bdn', xf, wv) + bv.T                        # (B, C, N)
    out = jnp.einsum('bcn,bmn->bcm', v, attn)                           # (B, C, N)
    return gamma[0, 0] * out.reshape(B, C, H, W) + x_nchw


if __name__ == "__main__":
    B, C, H, W = 2, 16, 16, 16        # in_dim=16 -> query/key dim = 16 // 8 = 2
    Cq = C // 8

    key = jax.random.PRNGKey(0)
    k_x, k_x2, k_wq, k_bq, k_wk, k_bk, k_wv, k_bv = jax.random.split(key, 8)

    x = jax.random.normal(k_x, (B, C, H, W), dtype=jnp.float32)

    # Conv2d weights [C_out, C_in, 1, 1] stored transposed as [C_in, C_out].
    wq = 0.1 * jax.random.normal(k_wq, (C, Cq), dtype=jnp.float32)
    bq = 0.1 * jax.random.normal(k_bq, (1, Cq), dtype=jnp.float32)
    wk = 0.1 * jax.random.normal(k_wk, (C, Cq), dtype=jnp.float32)
    bk = 0.1 * jax.random.normal(k_bk, (1, Cq), dtype=jnp.float32)
    wv = 0.1 * jax.random.normal(k_wv, (C, C), dtype=jnp.float32)
    bv = 0.1 * jax.random.normal(k_bv, (1, C), dtype=jnp.float32)
    # PyTorch __init__ sets gamma = 0 (output == x); use a nonzero value so the
    # attention path is actually exercised numerically.
    gamma = jnp.full((1, 1), 0.5, dtype=jnp.float32)

    tol = dict(atol=1e-2, rtol=1e-2)  # bf16 MXU operands (+ bf16 exp on v6e/v7x)

    # (1) Default tiles: kv grid axis collapses (tk == N), hoisted q projection.
    ref = self_attention_ref(x, wq, bq, wk, bk, wv, bv, gamma)
    out = jax.block_until_ready(self_attention(x, wq, bq, wk, bk, wv, bv, gamma))
    assert out.shape == (B, C, H, W)
    assert jnp.allclose(out, ref, **tol), \
        f"max abs err {jnp.max(jnp.abs(out - ref))}"

    # (2) Small tiles: full flash grid (2 query tiles x 2 kv tiles), online softmax.
    out2 = jax.block_until_ready(
        self_attention(x, wq, bq, wk, bk, wv, bv, gamma, tq=128, tk=128))
    assert jnp.allclose(out2, ref, **tol), \
        f"max abs err {jnp.max(jnp.abs(out2 - ref))}"

    # (3) Non-lane-aligned spatial size (H*W = 144): padded-N + masked-kv path.
    x2 = jax.random.normal(k_x2, (B, C, 12, 12), dtype=jnp.float32)
    ref2 = self_attention_ref(x2, wq, bq, wk, bk, wv, bv, gamma)
    out3 = jax.block_until_ready(self_attention(x2, wq, bq, wk, bk, wv, bv, gamma))
    assert out3.shape == (B, C, 12, 12)
    assert jnp.allclose(out3, ref2, **tol), \
        f"max abs err {jnp.max(jnp.abs(out3 - ref2))}"

    print("KERNEL_OK")
</pallas_src>

<mosaic_0001>
module attributes {stable_mosaic.version = 11 : i64} {
  func.func @_self_attention_kernel(%arg0: i32, %arg1: i32, %arg2: i32, %arg3: memref<1x16x256xf32, #tpu.memory_space<vmem>>, %arg4: memref<1x16x256xbf16, #tpu.memory_space<vmem>>, %arg5: memref<8x16xbf16, #tpu.memory_space<vmem>>, %arg6: memref<8x1xf32, #tpu.memory_space<vmem>>, %arg7: memref<24x16xbf16, #tpu.memory_space<vmem>>, %arg8: memref<24x1xf32, #tpu.memory_space<vmem>>, %arg9: memref<1x1xf32, #tpu.memory_space<smem>>, %arg10: memref<1x16x256xf32, #tpu.memory_space<vmem>>, %arg11: memref<8x256xbf16, #tpu.memory_space<vmem>>, %arg12: memref<1x256xf32, #tpu.memory_space<vmem>>, %arg13: memref<1x256xf32, #tpu.memory_space<vmem>>, %arg14: memref<16x256xf32, #tpu.memory_space<vmem>>) attributes {dimension_semantics = [#tpu.dimension_semantics<parallel>, #tpu.dimension_semantics<parallel>, #tpu.dimension_semantics<arbitrary>], iteration_bounds = array<i64: 2, 1, 1>, scalar_prefetch = 0 : i64, scratch_operands = 4 : i64, tpu.core_type = #tpu.core_type<tc>, window_params = [{transform_indices = @transform_0, window_bounds = array<i64: 1, 16, 256>}, {transform_indices = @transform_1, window_bounds = array<i64: 1, 16, 256>}, {pipeline_mode = #tpu.pipeline_mode<synchronous>, transform_indices = @transform_2, window_bounds = array<i64: 8, 16>}, {pipeline_mode = #tpu.pipeline_mode<synchronous>, transform_indices = @transform_3, window_bounds = array<i64: 8, 1>}, {pipeline_mode = #tpu.pipeline_mode<synchronous>, transform_indices = @transform_4, window_bounds = array<i64: 24, 16>}, {pipeline_mode = #tpu.pipeline_mode<synchronous>, transform_indices = @transform_5, window_bounds = array<i64: 24, 1>}, {transform_indices = @transform_6, window_bounds = array<i64: 1, 1>}, {transform_indices = @transform_7, window_bounds = array<i64: 1, 16, 256>}]} {
    %c0_i32 = arith.constant 0 : i32
    %0 = arith.cmpi eq, %arg2, %c0_i32 : i32
    %1 = arith.extui %0 : i1 to i32
    %c0_i32_0 = arith.constant 0 : i32
    %2 = arith.cmpi ne, %1, %c0_i32_0 : i32
    scf.if %2 {
      %cst_27 = arith.constant 0xFF800000 : f32
      %42 = vector.broadcast %cst_27 : f32 to vector<1x256xf32>
      %c0_28 = arith.constant 0 : index
      %c0_29 = arith.constant 0 : index
      %43 = vector.load %arg12[%c0_28, %c0_29] : memref<1x256xf32, #tpu.memory_space<vmem>>, vector<1x256xf32>
      tpu.vector_store %arg12[%c0_28, %c0_29], %42 {strides = array<i32>} : memref<1x256xf32, #tpu.memory_space<vmem>>, vector<1x256xf32>,
      %cst_30 = arith.constant 0.000000e+00 : f32
      %44 = vector.broadcast %cst_30 : f32 to vector<1x256xf32>
      %c0_31 = arith.constant 0 : index
      %c0_32 = arith.constant 0 : index
      %45 = vector.load %arg13[%c0_31, %c0_32] : memref<1x256xf32, #tpu.memory_space<vmem>>, vector<1x256xf32>
      tpu.vector_store %arg13[%c0_31, %c0_32], %44 {strides = array<i32>} : memref<1x256xf32, #tpu.memory_space<vmem>>, vector<1x256xf32>,
      %cst_33 = arith.constant 0.000000e+00 : f32
      %46 = vector.broadcast %cst_33 : f32 to vector<16x256xf32>
      %c0_34 = arith.constant 0 : index
      %c0_35 = arith.constant 0 : index
      %47 = vector.load %arg14[%c0_34, %c0_35] : memref<16x256xf32, #tpu.memory_space<vmem>>, vector<16x256xf32>
      tpu.vector_store %arg14[%c0_34, %c0_35], %46 {strides = array<i32>} : memref<16x256xf32, #tpu.memory_space<vmem>>, vector<16x256xf32>,
      %c0_36 = arith.constant 0 : index
      %c0_37 = arith.constant 0 : index
      %c0_38 = arith.constant 0 : index
      %48 = vector.load %arg3[%c0_36, %c0_37, %c0_38] : memref<1x16x256xf32, #tpu.memory_space<vmem>>, vector<1x16x256xf32>
      %49 = vector.shape_cast %48 : vector<1x16x256xf32> to vector<16x256xf32>
      %50 = arith.truncf %49 : vector<16x256xf32> to vector<16x256xbf16>
      %c0_39 = arith.constant 0 : index
      %c0_40 = arith.constant 0 : index
      %51 = vector.load %arg5[%c0_39, %c0_40] : memref<8x16xbf16, #tpu.memory_space<vmem>>, vector<8x16xbf16>
      %cst_41 = arith.constant dense<0.000000e+00> : vector<8x256xf32>
      %52 = tpu.matmul %51, %50, %cst_41 {dimension_numbers = #tpu.dot_dimension_numbers<[1], [0], [0], [1], [0, 0, 1, 1], [], []>} : vector<8x16xbf16>, vector<16x256xbf16>, vector<8x256xf32> -> vector<8x256xf32>
      %c0_42 = arith.constant 0 : index
      %c0_43 = arith.constant 0 : index
      %53 = vector.load %arg6[%c0_42, %c0_43] : memref<8x1xf32, #tpu.memory_space<vmem>>, vector<8x1xf32>
      %54 = vector.broadcast %53 : vector<8x1xf32> to vector<8x256xf32>
      %55 = arith.addf %52, %54 : vector<8x256xf32>
      %56 = arith.truncf %55 : vector<8x256xf32> to vector<8x256xbf16>
      %c0_44 = arith.constant 0 : index
      %c0_45 = arith.constant 0 : index
      %57 = vector.load %arg11[%c0_44, %c0_45] : memref<8x256xbf16, #tpu.memory_space<vmem>>, vector<8x256xbf16>
      tpu.vector_store %arg11[%c0_44, %c0_45], %56 {strides = array<i32>} : memref<8x256xbf16, #tpu.memory_space<vmem>>, vector<8x256xbf16>,
    } else {
    }
    %c0 = arith.constant 0 : index
    %c0_1 = arith.constant 0 : index
    %3 = vector.load %arg7[%c0, %c0_1] : memref<24x16xbf16, #tpu.memory_space<vmem>>, vector<24x16xbf16>
    %c0_2 = arith.constant 0 : index
    %c0_3 = arith.constant 0 : index
    %c0_4 = arith.constant 0 : index
    %4 = vector.load %arg4[%c0_2, %c0_3, %c0_4] : memref<1x16x256xbf16, #tpu.memory_space<vmem>>, vector<1x16x256xbf16>
    %5 = vector.shape_cast %4 : vector<1x16x256xbf16> to vector<16x256xbf16>
    %cst = arith.constant dense<0.000000e+00> : vector<24x256xf32>
    %6 = tpu.matmul %3, %5, %cst {dimension_numbers = #tpu.dot_dimension_numbers<[1], [0], [0], [1], [0, 0, 1, 1], [], []>} : vector<24x16xbf16>, vector<16x256xbf16>, vector<24x256xf32> -> vector<24x256xf32>
    %c0_5 = arith.constant 0 : index
    %c0_6 = arith.constant 0 : index
    %7 = vector.load %arg8[%c0_5, %c0_6] : memref<24x1xf32, #tpu.memory_space<vmem>>, vector<24x1xf32>
    %8 = vector.broadcast %7 : vector<24x1xf32> to vector<24x256xf32>
    %9 = arith.addf %6, %8 : vector<24x256xf32>
    %10 = vector.extract_strided_slice %9 {offsets = [0, 0], sizes = [8, 256], strides = [1, 1]} : vector<24x256xf32> to vector<8x256xf32>
    %11 = arith.truncf %10 : vector<8x256xf32> to vector<8x256xbf16>
    %12 = vector.extract_strided_slice %9 {offsets = [8, 0], sizes = [16, 256], strides = [1, 1]} : vector<24x256xf32> to vector<16x256xf32>
    %13 = arith.truncf %12 : vector<16x256xf32> to vector<16x256xbf16>
    %c0_7 = arith.constant 0 : index
    %c0_8 = arith.constant 0 : index
    %14 = vector.load %arg11[%c0_7, %c0_8] : memref<8x256xbf16, #tpu.memory_space<vmem>>, vector<8x256xbf16>
    %cst_9 = arith.constant dense<0.000000e+00> : vector<256x256xf32>
    %15 = tpu.matmul %11, %14, %cst_9 {dimension_numbers = #tpu.dot_dimension_numbers<[0], [0], [1], [1], [0, 1, 1, 1], [], []>} : vector<8x256xbf16>, vector<8x256xbf16>, vector<256x256xf32> -> vector<256x256xf32>
    %c0_10 = arith.constant 0 : index
    %c0_11 = arith.constant 0 : index
    %16 = vector.load %arg12[%c0_10, %c0_11] : memref<1x256xf32, #tpu.memory_space<vmem>>, vector<1x256xf32>
    %cst_12 = arith.constant dense<0xFF800000> : vector<256xf32>
    %17 = vector.multi_reduction <maximumf>, %15, %cst_12 [0] : vector<256x256xf32> to vector<256xf32>
    %18 = vector.shape_cast %17 : vector<256xf32> to vector<1x256xf32>
    %19 = arith.maximumf %16, %18 : vector<1x256xf32>
    %20 = arith.subf %16, %19 : vector<1x256xf32>
    %21 = math.exp %20 : vector<1x256xf32>
    %22 = vector.broadcast %19 : vector<1x256xf32> to vector<256x256xf32>
    %23 = arith.subf %15, %22 : vector<256x256xf32>
    %24 = math.exp %23 : vector<256x256xf32>
    %c0_13 = arith.constant 0 : index
    %c0_14 = arith.constant 0 : index
    %25 = vector.load %arg13[%c0_13, %c0_14] : memref<1x256xf32, #tpu.memory_space<vmem>>, vector<1x256xf32>
    %26 = arith.mulf %21, %25 : vector<1x256xf32>
    %cst_15 = arith.constant dense<0.000000e+00> : vector<256xf32>
    %27 = vector.multi_reduction <add>, %24, %cst_15 [0] : vector<256x256xf32> to vector<256xf32>
    %28 = vector.shape_cast %27 : vector<256xf32> to vector<1x256xf32>
    %29 = arith.addf %26, %28 : vector<1x256xf32>
    %c0_16 = arith.constant 0 : index
    %c0_17 = arith.constant 0 : index
    %30 = vector.load %arg13[%c0_16, %c0_17] : memref<1x256xf32, #tpu.memory_space<vmem>>, vector<1x256xf32>
    tpu.vector_store %arg13[%c0_16, %c0_17], %29 {strides = array<i32>} : memref<1x256xf32, #tpu.memory_space<vmem>>, vector<1x256xf32>,
    %c0_18 = arith.constant 0 : index
    %c0_19 = arith.constant 0 : index
    %31 = vector.load %arg14[%c0_18, %c0_19] : memref<16x256xf32, #tpu.memory_space<vmem>>, vector<16x256xf32>
    %32 = vector.broadcast %21 : vector<1x256xf32> to vector<16x256xf32>
    %33 = arith.mulf %32, %31 : vector<16x256xf32>
    %34 = arith.truncf %24 : vector<256x256xf32> to vector<256x256xbf16>
    %cst_20 = arith.constant dense<0.000000e+00> : vector<16x256xf32>
    %35 = tpu.matmul %13, %34, %cst_20 {dimension_numbers = #tpu.dot_dimension_numbers<[1], [0], [0], [1], [0, 0, 1, 1], [], []>} : vector<16x256xbf16>, vector<256x256xbf16>, vector<16x256xf32> -> vector<16x256xf32>
    %36 = arith.addf %33, %35 : vector<16x256xf32>
    %c0_21 = arith.constant 0 : index
    %c0_22 = arith.constant 0 : index
    %37 = vector.load %arg14[%c0_21, %c0_22] : memref<16x256xf32, #tpu.memory_space<vmem>>, vector<16x256xf32>
    tpu.vector_store %arg14[%c0_21, %c0_22], %36 {strides = array<i32>} : memref<16x256xf32, #tpu.memory_space<vmem>>, vector<16x256xf32>,
    %c0_23 = arith.constant 0 : index
    %c0_24 = arith.constant 0 : index
    %38 = vector.load %arg12[%c0_23, %c0_24] : memref<1x256xf32, #tpu.memory_space<vmem>>, vector<1x256xf32>
    tpu.vector_store %arg12[%c0_23, %c0_24], %19 {strides = array<i32>} : memref<1x256xf32, #tpu.memory_space<vmem>>, vector<1x256xf32>,
    %c0_i32_25 = arith.constant 0 : i32
    %39 = arith.cmpi eq, %arg2, %c0_i32_25 : i32
    %40 = arith.extui %39 : i1 to i32
    %c0_i32_26 = arith.constant 0 : i32
    %41 = arith.cmpi ne, %40, %c0_i32_26 : i32
    scf.if %41 {
      %c0_27 = arith.constant 0 : index
      %c0_28 = arith.constant 0 : index
      %42 = vector.load %arg14[%c0_27, %c0_28] : memref<16x256xf32, #tpu.memory_space<vmem>>, vector<16x256xf32>
      %c0_29 = arith.constant 0 : index
      %c0_30 = arith.constant 0 : index
      %43 = vector.load %arg13[%c0_29, %c0_30] : memref<1x256xf32, #tpu.memory_space<vmem>>, vector<1x256xf32>
      %44 = vector.broadcast %43 : vector<1x256xf32> to vector<16x256xf32>
      %45 = arith.divf %42, %44 : vector<16x256xf32>
      %c0_31 = arith.constant 0 : index
      %c0_32 = arith.constant 0 : index
      %46 = memref.load %arg9[%c0_31, %c0_32] : memref<1x1xf32, #tpu.memory_space<smem>>
      %47 = vector.broadcast %46 : f32 to vector<16x256xf32>
      %48 = arith.mulf %47, %45 : vector<16x256xf32>
      %c0_33 = arith.constant 0 : index
      %c0_34 = arith.constant 0 : index
      %c0_35 = arith.constant 0 : index
      %49 = vector.load %arg3[%c0_33, %c0_34, %c0_35] : memref<1x16x256xf32, #tpu.memory_space<vmem>>, vector<1x16x256xf32>
      %50 = vector.shape_cast %49 : vector<1x16x256xf32> to vector<16x256xf32>
      %51 = arith.addf %48, %50 : vector<16x256xf32>
      %c0_36 = arith.constant 0 : index
      %c0_37 = arith.constant 0 : index
      %c0_38 = arith.constant 0 : index
      %52 = vector.load %arg10[%c0_36, %c0_37, %c0_38] : memref<1x16x256xf32, #tpu.memory_space<vmem>>, vector<1x16x256xf32>
      %53 = vector.shape_cast %52 : vector<1x16x256xf32> to vector<16x256xf32>
      %54 = vector.shape_cast %51 : vector<16x256xf32> to vector<1x16x256xf32>
      tpu.vector_store %arg10[%c0_36, %c0_37, %c0_38], %54 {strides = array<i32>} : memref<1x16x256xf32, #tpu.memory_space<vmem>>, vector<1x16x256xf32>,
    } else {
    }
    return
  }
  func.func @transform_0(%arg0: i32, %arg1: i32, %arg2: i32) -> (i32, i32, i32) {
    %c0_i32 = arith.constant 0 : i32
    %c0_i32_0 = arith.constant 0 : i32
    return %arg0, %c0_i32, %arg1 : i32, i32, i32
  }
  func.func @transform_1(%arg0: i32, %arg1: i32, %arg2: i32) -> (i32, i32, i32) {
    %c0_i32 = arith.constant 0 : i32
    %c0_i32_0 = arith.constant 0 : i32
    return %arg0, %c0_i32, %arg2 : i32, i32, i32
  }
  func.func @transform_2(%arg0: i32, %arg1: i32, %arg2: i32) -> (i32, i32) {
    %c0_i32 = arith.constant 0 : i32
    %c0_i32_0 = arith.constant 0 : i32
    %c0_i32_1 = arith.constant 0 : i32
    return %c0_i32, %c0_i32_0 : i32, i32
  }
  func.func @transform_3(%arg0: i32, %arg1: i32, %arg2: i32) -> (i32, i32) {
    %c0_i32 = arith.constant 0 : i32
    %c0_i32_0 = arith.constant 0 : i32
    %c0_i32_1 = arith.constant 0 : i32
    return %c0_i32, %c0_i32_0 : i32, i32
  }
  func.func @transform_4(%arg0: i32, %arg1: i32, %arg2: i32) -> (i32, i32) {
    %c0_i32 = arith.constant 0 : i32
    %c0_i32_0 = arith.constant 0 : i32
    %c0_i32_1 = arith.constant 0 : i32
    return %c0_i32, %c0_i32_0 : i32, i32
  }
  func.func @transform_5(%arg0: i32, %arg1: i32, %arg2: i32) -> (i32, i32) {
    %c0_i32 = arith.constant 0 : i32
    %c0_i32_0 = arith.constant 0 : i32
    %c0_i32_1 = arith.constant 0 : i32
    return %c0_i32, %c0_i32_0 : i32, i32
  }
  func.func @transform_6(%arg0: i32, %arg1: i32, %arg2: i32) -> (i32, i32) {
    %c0_i32 = arith.constant 0 : i32
    %c0_i32_0 = arith.constant 0 : i32
    %c0_i32_1 = arith.constant 0 : i32
    return %c0_i32, %c0_i32_0 : i32, i32
  }
  func.func @transform_7(%arg0: i32, %arg1: i32, %arg2: i32) -> (i32, i32, i32) {
    %c0_i32 = arith.constant 0 : i32
    %c0_i32_0 = arith.constant 0 : i32
    return %arg0, %c0_i32, %arg1 : i32, i32, i32
  }
}

</mosaic_0001>

<llo_original>
// kernel: tpu_custom_call.1
$region0: #{tpu_custom_call.1}
  #allocation0 [shape = 'u32[]', space=smem, size = 0x4, offset = 0x4, fixed_abs, tag = 'smem constant byte address 0x4 - core index']
  #allocation1 [shape = 'u32[144,128]{1,0:T(1,128)}', space=vmem, size = 0x12000, scoped, tag = 'internal scratch']
  #allocation2 [shape = 'bf16[8,256]{1,0:T(8,128)(2,1)}', space=vmem, size = 0x1000, scoped, tag = 'scratch operand']
  #allocation3 [shape = 'f32[1,256]{1,0:T(1,128)}', space=vmem, size = 0x400, scoped, tag = 'scratch operand']
  #allocation4 [shape = 'f32[1,256]{1,0:T(1,128)}', space=vmem, size = 0x400, scoped, tag = 'scratch operand']
  #allocation5 [shape = 'f32[16,256]{1,0:T(8,128)}', space=vmem, size = 0x4000, scoped, tag = 'scratch operand']
  #allocation6 [shape = 'f32[1,1]{1,0:T(1,128)S(6)}', space=smem, size = 0x200, scoped, tag = 'scoped memory for tpu_custom_call.1']
  %s0 = inlined_call_operand.hbm [shape: f32[2,16,256], index: 0, kind: input, shape index: {}]
  %s1 = inlined_call_operand.hbm [shape: bf16[2,16,256], index: 1, kind: input, shape index: {}]
  %s2 = inlined_call_operand.hbm [shape: bf16[8,16], index: 2, kind: input, shape index: {}]
  %s3 = inlined_call_operand.hbm [shape: f32[8,1], index: 3, kind: input, shape index: {}]
  %s4 = inlined_call_operand.hbm [shape: bf16[24,16], index: 4, kind: input, shape index: {}]
  %s5 = inlined_call_operand.hbm [shape: f32[24,1], index: 5, kind: input, shape index: {}]
  %s6 = inlined_call_operand.<no memory space> [shape: f32[1,1], index: 6, kind: input, shape index: {}]
  %s7 = inlined_call_operand.hbm [shape: f32[2,16,256], index: 7, kind: output, shape index: {}]
  %s8 = sld [smem:[#allocation0]]
  $region93: #{tpu_custom_call.1} parent=0
    _
  %s10 = ssub.s32 1, %s8
  %s11 = scalar_select 0, %s10, %s8
  %12 = sst [smem:[#allocation6]] %s6
  $region1: #{tpu_custom_call.1} parent=0
    #allocation7 [shape = 'u8[32768]{0}', space=vmem, size = 0x8000, scoped, tag = 'input window, operand 0']
    #allocation8 [shape = 's32[2]{0}', space=sflag, size = 0x8, scoped, tag = 'scoped memory for tpu_custom_call.1']
    #allocation9 [shape = 's32[2]{0}', space=sflag, size = 0x8, scoped, tag = 'scoped memory for tpu_custom_call.1']
    #allocation10 [shape = 'u8[16384]{0}', space=vmem, size = 0x4000, scoped, tag = 'input window, operand 1']
    #allocation11 [shape = 's32[2]{0}', space=sflag, size = 0x8, scoped, tag = 'scoped memory for tpu_custom_call.1']
    #allocation12 [shape = 'u8[2048]{0}', space=vmem, size = 0x800, scoped, tag = 'input window, operand 2, single buffered']
    #allocation13 [shape = 'u8[4096]{0}', space=vmem, size = 0x1000, scoped, tag = 'input window, operand 3, single buffered']
    #allocation14 [shape = 's32[1]{0}', space=sflag, size = 0x4, scoped, tag = 'scoped memory for tpu_custom_call.1']
    #allocation15 [shape = 'u8[6144]{0}', space=vmem, size = 0x1800, scoped, tag = 'input window, operand 4, single buffered']
    #allocation16 [shape = 'u8[12288]{0}', space=vmem, size = 0x3000, scoped, tag = 'input window, operand 5, single buffered']
    #allocation17 [shape = 's32[1]{0}', space=sflag, size = 0x4, scoped, tag = 'scoped memory for tpu_custom_call.1']
    #allocation18 [shape = 'u8[32768]{0}', space=vmem, size = 0x8000, scoped, tag = 'output window, operand 0']
    %13 = vsyncpa [#allocation8], 0
    %s14 = scalar_lea.sflag [#allocation8], 1
    %15 = vsyncpa %s14, 0
    %16 = vsyncpa [#allocation11], 0
    %s17 = scalar_lea.sflag [#allocation11], 1
    %18 = vsyncpa %s17, 0
    %19 = vsyncpa [#allocation14], 0
    %20 = vsyncpa [#allocation17], 0
    %21 = vsyncpa [#allocation9], 0
    %s22 = scalar_lea.sflag [#allocation9], 1
    %23 = vsyncpa %s22, 0
    loop: start=0, step=1, limit=4
    $region2: #{tpu_custom_call.1} parent=1 // loop_pre_header
      _
    $region3: #{tpu_custom_call.1} parent=1 // loop_header
      %s25 = sphi 0, %s29
      %p26 = scmp.ge.s32.totalorder %s25, 4
      %s32 = sphi 0, %s51
      %s33 = sphi 0, %s47
      %s34 = sphi 0, %s43
      %s35 = sphi 0, %s32
      %s36 = sphi 0, %s33
      %s37 = sphi 0, %s34
      %s38 = sphi 0, %s35
      %s39 = sphi 0, %s36
      %s40 = sphi 0, %s37
      %s56 = sphi 0, %s58
      %s59 = sphi 0, %s56
      %s60 = sphi 0, %s59
      %s76 = sphi 0, %s60
      %s84 = sphi 0, %s86
      %s87 = sphi 0, %s84
      %s88 = sphi 0, %s87
      %s104 = sphi 0, %s88
      %s108 = sphi 0, %s108
      %s110 = sphi 0, %s108
      %s111 = sphi 0, %s110
      %s125 = sphi 0, %s111
      %s129 = sphi 0, %s129
      %s131 = sphi 0, %s129
      %s132 = sphi 0, %s131
      %s146 = sphi 0, %s132
      %s150 = sphi 0, %s150
      %s152 = sphi 0, %s150
      %s153 = sphi 0, %s152
      %s167 = sphi 0, %s153
      %s171 = sphi 0, %s171
      %s173 = sphi 0, %s171
      %s174 = sphi 0, %s173
      %s188 = sphi 0, %s174
      %s192 = sphi 0, %s192
      %s194 = sphi 0, %s192
      %s195 = sphi 0, %s194
      %s209 = sphi 0, %s195
      %s217 = sphi 0, %s219
      %s220 = sphi 0, %s217
      %s221 = sphi 0, %s220
      %s237 = sphi 0, %s221
    $region4: #{tpu_custom_call.1} parent=1 // loop_header_branch
      %28 = sbr.rel (%p26) target = $region8
    $region5: #{tpu_custom_call.1} parent=1 // loop_body
      %s30 = ssub.s32 %s25, 1
      %s31 = ssub.s32 %s25, 2
      %s41 = sadd.s32 1, %s34
      %p42 = scmp.ge.s32.totalorder %s41, 1
      %s43 = scalar_select %p42, 0, %s41
      %s44 = sadd.s32 1, %s33
      %s45 = scalar_select %p42, %s44, %s33
      %p46 = scmp.ge.s32.totalorder %s45, 1
      %s47 = scalar_select %p46, 0, %s45
      %s48 = sadd.s32 1, %s32
      %s49 = scalar_select %p46, %s48, %s32
      %p50 = scmp.ge.s32.totalorder %s49, 2
      %s51 = scalar_select %p50, 0, %s49
      %s52 = ssub.s32 %s32, %s51
      %s53 = ssub.s32 %s33, %s47
      %s54 = sor.u32 %s52, %s53
      %p55 = scmp.eq.s32.totalorder %s54, 0
      %s57 = sadd.s32 %s56, 1
      %s58 = scalar_select %p55, %s56, %s57
      %p61 = pneg %p55
      %p62 = scmp.eq.s32.totalorder %s25, 1
      %p63 = por %p61, %p62
      %p64 = scmp.ne.s32.totalorder %s56, %s59
      %p65 = scmp.eq.s32.totalorder %s25, 0
      %p66 = por %p64, %p65
      %p67 = scmp.ne.s32.totalorder %s56, %s59
      %p68 = scmp.eq.s32.totalorder %s30, 1
      %p69 = por %p67, %p68
      %p70 = scmp.ne.s32.totalorder %s59, %s60
      %p71 = scmp.eq.s32.totalorder %s30, 0
      %p72 = por %p70, %p71
      %p73 = scmp.ne.s32.totalorder %s59, %s60
      %p74 = scmp.eq.s32.totalorder %s31, 1
      %p75 = por %p73, %p74
      %p77 = scmp.ne.s32.totalorder %s60, %s76
      %p78 = scmp.eq.s32.totalorder %s31, 0
      %p79 = por %p77, %p78
      %s80 = ssub.s32 %s32, %s51
      %s81 = ssub.s32 %s34, %s43
      %s82 = sor.u32 %s80, %s81
      %p83 = scmp.eq.s32.totalorder %s82, 0
      %s85 = sadd.s32 %s84, 1
      %s86 = scalar_select %p83, %s84, %s85
      %p89 = pneg %p83
      %p90 = scmp.eq.s32.totalorder %s25, 1
      %p91 = por %p89, %p90
      %p92 = scmp.ne.s32.totalorder %s84, %s87
      %p93 = scmp.eq.s32.totalorder %s25, 0
      %p94 = por %p92, %p93
      %p95 = scmp.ne.s32.totalorder %s84, %s87
      %p96 = scmp.eq.s32.totalorder %s30, 1
      %p97 = por %p95, %p96
      %p98 = scmp.ne.s32.totalorder %s87, %s88
      %p99 = scmp.eq.s32.totalorder %s30, 0
      %p100 = por %p98, %p99
      %p101 = scmp.ne.s32.totalorder %s87, %s88
      %p102 = scmp.eq.s32.totalorder %s31, 1
      %p103 = por %p101, %p102
      %p105 = scmp.ne.s32.totalorder %s88, %s104
      %p106 = scmp.eq.s32.totalorder %s31, 0
      %p107 = por %p105, %p106
      %s109 = sadd.s32 %s108, 1
      %p112 = scmp.eq.s32.totalorder %s25, 1
      %p113 = scmp.ne.s32.totalorder %s108, %s110
      %p114 = scmp.eq.s32.totalorder %s25, 0
      %p115 = por %p113, %p114
      %p116 = scmp.ne.s32.totalorder %s108, %s110
      %p117 = scmp.eq.s32.totalorder %s30, 1
      %p118 = por %p116, %p117
      %p119 = scmp.ne.s32.totalorder %s110, %s111
      %p120 = scmp.eq.s32.totalorder %s30, 0
      %p121 = por %p119, %p120
      %p122 = scmp.ne.s32.totalorder %s110, %s111
      %p123 = scmp.eq.s32.totalorder %s31, 1
      %p124 = por %p122, %p123
      %p126 = scmp.ne.s32.totalorder %s111, %s125
      %p127 = scmp.eq.s32.totalorder %s31, 0
      %p128 = por %p126, %p127
      %s130 = sadd.s32 %s129, 1
      %p133 = scmp.eq.s32.totalorder %s25, 1
      %p134 = scmp.ne.s32.totalorder %s129, %s131
      %p135 = scmp.eq.s32.totalorder %s25, 0
      %p136 = por %p134, %p135
      %p137 = scmp.ne.s32.totalorder %s129, %s131
      %p138 = scmp.eq.s32.totalorder %s30, 1
      %p139 = por %p137, %p138
      %p140 = scmp.ne.s32.totalorder %s131, %s132
      %p141 = scmp.eq.s32.totalorder %s30, 0
      %p142 = por %p140, %p141
      %p143 = scmp.ne.s32.totalorder %s131, %s132
      %p144 = scmp.eq.s32.totalorder %s31, 1
      %p145 = por %p143, %p144
      %p147 = scmp.ne.s32.totalorder %s132, %s146
      %p148 = scmp.eq.s32.totalorder %s31, 0
      %p149 = por %p147, %p148
      %s151 = sadd.s32 %s150, 1
      %p154 = scmp.eq.s32.totalorder %s25, 1
      %p155 = scmp.ne.s32.totalorder %s150, %s152
      %p156 = scmp.eq.s32.totalorder %s25, 0
      %p157 = por %p155, %p156
      %p158 = scmp.ne.s32.totalorder %s150, %s152
      %p159 = scmp.eq.s32.totalorder %s30, 1
      %p160 = por %p158, %p159
      %p161 = scmp.ne.s32.totalorder %s152, %s153
      %p162 = scmp.eq.s32.totalorder %s30, 0
      %p163 = por %p161, %p162
      %p164 = scmp.ne.s32.totalorder %s152, %s153
      %p165 = scmp.eq.s32.totalorder %s31, 1
      %p166 = por %p164, %p165
      %p168 = scmp.ne.s32.totalorder %s153, %s167
      %p169 = scmp.eq.s32.totalorder %s31, 0
      %p170 = por %p168, %p169
      %s172 = sadd.s32 %s171, 1
      %p175 = scmp.eq.s32.totalorder %s25, 1
      %p176 = scmp.ne.s32.totalorder %s171, %s173
      %p177 = scmp.eq.s32.totalorder %s25, 0
      %p178 = por %p176, %p177
      %p179 = scmp.ne.s32.totalorder %s171, %s173
      %p180 = scmp.eq.s32.totalorder %s30, 1
      %p181 = por %p179, %p180
      %p182 = scmp.ne.s32.totalorder %s173, %s174
      %p183 = scmp.eq.s32.totalorder %s30, 0
      %p184 = por %p182, %p183
      %p185 = scmp.ne.s32.totalorder %s173, %s174
      %p186 = scmp.eq.s32.totalorder %s31, 1
      %p187 = por %p185, %p186
      %p189 = scmp.ne.s32.totalorder %s174, %s188
      %p190 = scmp.eq.s32.totalorder %s31, 0
      %p191 = por %p189, %p190
      %s193 = sadd.s32 %s192, 1
      %p196 = scmp.eq.s32.totalorder %s25, 1
      %p197 = scmp.ne.s32.totalorder %s192, %s194
      %p198 = scmp.eq.s32.totalorder %s25, 0
      %p199 = por %p197, %p198
      %p200 = scmp.ne.s32.totalorder %s192, %s194
      %p201 = scmp.eq.s32.totalorder %s30, 1
      %p202 = por %p200, %p201
      %p203 = scmp.ne.s32.totalorder %s194, %s195
      %p204 = scmp.eq.s32.totalorder %s30, 0
      %p205 = por %p203, %p204
      %p206 = scmp.ne.s32.totalorder %s194, %s195
      %p207 = scmp.eq.s32.totalorder %s31, 1
      %p208 = por %p206, %p207
      %p210 = scmp.ne.s32.totalorder %s195, %s209
      %p211 = scmp.eq.s32.totalorder %s31, 0
      %p212 = por %p210, %p211
      %s213 = ssub.s32 %s32, %s51
      %s214 = ssub.s32 %s33, %s47
      %s215 = sor.u32 %s213, %s214
      %p216 = scmp.eq.s32.totalorder %s215, 0
      %s218 = sadd.s32 %s217, 1
      %s219 = scalar_select %p216, %s217, %s218
      %p222 = pneg %p216
      %p223 = scmp.eq.s32.totalorder %s25, 1
      %p224 = por %p222, %p223
      %p225 = scmp.ne.s32.totalorder %s217, %s220
      %p226 = scmp.eq.s32.totalorder %s25, 0
      %p227 = por %p225, %p226
      %p228 = scmp.ne.s32.totalorder %s217, %s220
      %p229 = scmp.eq.s32.totalorder %s30, 1
      %p230 = por %p228, %p229
      %p231 = scmp.ne.s32.totalorder %s220, %s221
      %p232 = scmp.eq.s32.totalorder %s30, 0
      %p233 = por %p231, %p232
      %p234 = scmp.ne.s32.totalorder %s220, %s221
      %p235 = scmp.eq.s32.totalorder %s31, 1
      %p236 = por %p234, %p235
      %p238 = scmp.ne.s32.totalorder %s221, %s237
      %p239 = scmp.eq.s32.totalorder %s31, 0
      %p240 = por %p238, %p239
      %p241 = scmp.le.s32.totalorder 1, %s25
      %p242 = scmp.lt.s32.totalorder %s25, 3
      %p243 = pnand %p241, %p242
      %p244 = pneg %p243
      // Predicated region
      $region9: #{tpu_custom_call.1} parent=5 // pred_check
        _
      $region10: #{tpu_custom_call.1} parent=5 // pred_check_branch
        %246 = sbr.rel (%p243) target = $region12
      $region11: #{tpu_custom_call.1} parent=5 // pred_region
        %s247 = ssub.s32 %s25, 1
        // Predicated region
        $region13: #{tpu_custom_call.1} parent=11 // pred_check
          %p248 = pneg %p121
        $region14: #{tpu_custom_call.1} parent=11 // pred_check_branch
          %250 = sbr.rel (%p248) target = $region16
        $region15: #{tpu_custom_call.1} parent=11 // pred_region
          %s252 = ssub.s32 64, 64
          %253 = vsyncadd [#allocation11], %s252
          %s255 = sshll.u32 [#allocation12], 4
          %s256 = int_to_ptr.vmem [resolvable:$true] %s255
          %258 = dma.hbm_to_vmem [thread:$0]  %s2, 64, %s256, [#allocation11]
        $region16: #{tpu_custom_call.1} parent=11 // pred_fallthru
          _
        // Predicated region
        $region17: #{tpu_custom_call.1} parent=11 // pred_check
          %p259 = pneg %p142
        $region18: #{tpu_custom_call.1} parent=11 // pred_check_branch
          %261 = sbr.rel (%p259) target = $region20
        $region19: #{tpu_custom_call.1} parent=11 // pred_region
          %s263 = ssub.s32 128, 128
          %264 = vsyncadd [#allocation14], %s263
          %s266 = sshll.u32 [#allocation13], 4
          %s267 = int_to_ptr.vmem [resolvable:$true] %s266
          %269 = dma.hbm_to_vmem [thread:$0]  %s3, 128, %s267, [#allocation14]
        $region20: #{tpu_custom_call.1} parent=11 // pred_fallthru
          _
        // Predicated region
        $region21: #{tpu_custom_call.1} parent=11 // pred_check
          %p270 = pneg %p163
        $region22: #{tpu_custom_call.1} parent=11 // pred_check_branch
          %272 = sbr.rel (%p270) target = $region24
        $region23: #{tpu_custom_call.1} parent=11 // pred_region
          %s274 = ssub.s32 192, 192
          %275 = vsyncadd [#allocation14], %s274
          %s276 = sshll.u32 [#allocation15], 4
          %s277 = int_to_ptr.vmem [resolvable:$true] %s276
          %282 = dma.hbm_to_vmem [thread:$0]  %s4, 192, %s277, [#allocation14], 64, 64, 4
        $region24: #{tpu_custom_call.1} parent=11 // pred_fallthru
          _
        // Predicated region
        $region25: #{tpu_custom_call.1} parent=11 // pred_check
          %p283 = pneg %p184
        $region26: #{tpu_custom_call.1} parent=11 // pred_check_branch
          %285 = sbr.rel (%p283) target = $region28
        $region27: #{tpu_custom_call.1} parent=11 // pred_region
          %s287 = ssub.s32 384, 384
          %288 = vsyncadd [#allocation17], %s287
          %s289 = sshll.u32 [#allocation16], 4
          %s290 = int_to_ptr.vmem [resolvable:$true] %s289
          %295 = dma.hbm_to_vmem [thread:$0]  %s5, 384, %s290, [#allocation17], 128, 128, 8
        $region28: #{tpu_custom_call.1} parent=11 // pred_fallthru
          _
        // Predicated region
        $region29: #{tpu_custom_call.1} parent=11 // pred_check
          %p296 = pneg %p205
        $region30: #{tpu_custom_call.1} parent=11 // pred_check_branch
          %298 = sbr.rel (%p296) target = $region32
        $region31: #{tpu_custom_call.1} parent=11 // pred_region
          _
        $region32: #{tpu_custom_call.1} parent=11 // pred_fallthru
          _
      $region12: #{tpu_custom_call.1} parent=5 // pred_fallthru
        _
      %p299 = scmp.lt.s32.totalorder %s25, 2
      // Predicated region
      $region33: #{tpu_custom_call.1} parent=5 // pred_check
        %p300 = pneg %p299
      $region34: #{tpu_custom_call.1} parent=5 // pred_check_branch
        %302 = sbr.rel (%p300) target = $region36
      $region35: #{tpu_custom_call.1} parent=5 // pred_region
        // Predicated region
        $region37: #{tpu_custom_call.1} parent=35 // pred_check
          %p303 = pneg %p66
        $region38: #{tpu_custom_call.1} parent=35 // pred_check_branch
          %305 = sbr.rel (%p303) target = $region40
        $region39: #{tpu_custom_call.1} parent=35 // pred_region
          %s306 = sand.u32 %s56, 1
          %s307 = scalar_lea.sflag [#allocation8], %s306
          %s308 = sand.u32 %s56, 1
          %s309 = smul.addr %s308, 32
          %s310 = scalar_lea.vmem [#allocation7], %s309
          %s311 = smul.u32 2, %s33
          %s313 = ssub.s32 512, 512
          %314 = vsyncadd %s307, %s313
          %s315 = smul.addr %s32, 4
          %s316 = sadd.s32 %s311, %s315
          %s317 = smul.addr %s316, 128
          %s318 = scalar_lea.hbm %s0, %s317
          %s319 = sshll.u32 %s310, 4
          %s320 = int_to_ptr.vmem [resolvable:$true] %s319
          %325 = dma.hbm_to_vmem [thread:$0]  %s318, 512, %s320, %s307, 256, 256, 16
        $region40: #{tpu_custom_call.1} parent=35 // pred_fallthru
          _
        // Predicated region
        $region41: #{tpu_custom_call.1} parent=35 // pred_check
          %p326 = pneg %p94
        $region42: #{tpu_custom_call.1} parent=35 // pred_check_branch
          %328 = sbr.rel (%p326) target = $region44
        $region43: #{tpu_custom_call.1} parent=35 // pred_region
          %s329 = sand.u32 %s25, 1
          %s330 = scalar_lea.sflag [#allocation11], %s329
          %s331 = sand.u32 %s84, 1
          %s332 = smul.addr %s331, 16
          %s333 = scalar_lea.vmem [#allocation10], %s332
          %s334 = smul.u32 2, %s34
          %s336 = ssub.s32 256, 256
          %337 = vsyncadd %s330, %s336
          %s338 = smul.addr %s32, 4
          %s339 = sadd.s32 %s334, %s338
          %s340 = smul.addr %s339, 64
          %s341 = scalar_lea.hbm %s1, %s340
          %s342 = sshll.u32 %s333, 4
          %s343 = int_to_ptr.vmem [resolvable:$true] %s342
          %348 = dma.hbm_to_vmem [thread:$0]  %s341, 256, %s343, %s330, 128, 128, 8
        $region44: #{tpu_custom_call.1} parent=35 // pred_fallthru
          _
      $region36: #{tpu_custom_call.1} parent=5 // pred_fallthru
        _
      %p349 = scmp.le.s32.totalorder 1, %s25
      %p350 = scmp.lt.s32.totalorder %s25, 3
      %p351 = pnand %p349, %p350
      %p352 = pneg %p351
      // Predicated region
      $region45: #{tpu_custom_call.1} parent=5 // pred_check
        _
      $region46: #{tpu_custom_call.1} parent=5 // pred_check_branch
        %354 = sbr.rel (%p351) target = $region48
      $region47: #{tpu_custom_call.1} parent=5 // pred_region
        %s355 = ssub.s32 %s25, 1
        %s356 = sand.u32 %s59, 1
        %s357 = scalar_lea.sflag [#allocation8], %s356
        %s358 = sand.u32 %s59, 1
        %s359 = smul.addr %s358, 32
        %s360 = scalar_lea.vmem [#allocation7], %s359
        // Predicated region
        $region49: #{tpu_custom_call.1} parent=47 // pred_check
          %p361 = pneg %p72
        $region50: #{tpu_custom_call.1} parent=47 // pred_check_branch
          %363 = sbr.rel (%p361) target = $region52
        $region51: #{tpu_custom_call.1} parent=47 // pred_region
          %364 = dma.done %s357, 512
        $region52: #{tpu_custom_call.1} parent=47 // pred_fallthru
          _
        %s365 = sand.u32 %s30, 1
        %s366 = scalar_lea.sflag [#allocation11], %s365
        %s367 = sand.u32 %s87, 1
        %s368 = smul.addr %s367, 16
        %s369 = scalar_lea.vmem [#allocation10], %s368
        // Predicated region
        $region53: #{tpu_custom_call.1} parent=47 // pred_check
          %p370 = pneg %p100
        $region54: #{tpu_custom_call.1} parent=47 // pred_check_branch
          %372 = sbr.rel (%p370) target = $region56
        $region55: #{tpu_custom_call.1} parent=47 // pred_region
          %373 = dma.done %s366, 256
        $region56: #{tpu_custom_call.1} parent=47 // pred_fallthru
          _
        // Predicated region
        $region57: #{tpu_custom_call.1} parent=47 // pred_check
          %p374 = pneg %p121
        $region58: #{tpu_custom_call.1} parent=47 // pred_check_branch
          %376 = sbr.rel (%p374) target = $region60
        $region59: #{tpu_custom_call.1} parent=47 // pred_region
          %377 = dma.done [#allocation11], 64
        $region60: #{tpu_custom_call.1} parent=47 // pred_fallthru
          _
        // Predicated region
        $region61: #{tpu_custom_call.1} parent=47 // pred_check
          %p378 = pneg %p142
        $region62: #{tpu_custom_call.1} parent=47 // pred_check_branch
          %380 = sbr.rel (%p378) target = $region64
        $region63: #{tpu_custom_call.1} parent=47 // pred_region
          %381 = dma.done [#allocation14], 128
        $region64: #{tpu_custom_call.1} parent=47 // pred_fallthru
          _
        // Predicated region
        $region65: #{tpu_custom_call.1} parent=47 // pred_check
          %p382 = pneg %p163
        $region66: #{tpu_custom_call.1} parent=47 // pred_check_branch
          %384 = sbr.rel (%p382) target = $region68
        $region67: #{tpu_custom_call.1} parent=47 // pred_region
          %385 = dma.done [#allocation14], 192
        $region68: #{tpu_custom_call.1} parent=47 // pred_fallthru
          _
        // Predicated region
        $region69: #{tpu_custom_call.1} parent=47 // pred_check
          %p386 = pneg %p184
        $region70: #{tpu_custom_call.1} parent=47 // pred_check_branch
          %388 = sbr.rel (%p386) target = $region72
        $region71: #{tpu_custom_call.1} parent=47 // pred_region
          %389 = dma.done [#allocation17], 384
        $region72: #{tpu_custom_call.1} parent=47 // pred_fallthru
          _
        %s390 = sand.u32 %s59, 1
        %s391 = scalar_lea.sflag [#allocation8], %s390
        %s392 = sand.u32 %s59, 1
        %s393 = smul.addr %s392, 32
        %s394 = scalar_lea.vmem [#allocation7], %s393
        %p395 = pneg %p72
        %p396 = pneg %p69
        %s397 = sand.u32 %s30, 1
        %s398 = scalar_lea.sflag [#allocation11], %s397
        %s399 = sand.u32 %s87, 1
        %s400 = smul.addr %s399, 16
        %s401 = scalar_lea.vmem [#allocation10], %s400
        %p402 = pneg %p100
        %p403 = pneg %p97
        %p404 = pneg %p121
        %p405 = pneg %p118
        %p406 = pneg %p142
        %p407 = pneg %p139
        %p408 = pneg %p163
        %p409 = pneg %p160
        %p410 = pneg %p184
        %p411 = pneg %p181
        %p412 = pneg %p205
        %p413 = pneg %p202
        %p414 = pneg %p233
        %p415 = pneg %p230
        %s416 = sand.u32 %s220, 1
        %s417 = scalar_lea.sflag [#allocation9], %s416
        %s418 = sand.u32 %s220, 1
        %s419 = smul.addr %s418, 32
        %s420 = scalar_lea.vmem [#allocation18], %s419
        %s421 = smul.u32 2, %s36
        %s422 = smul.u32 2, %s37
        %s423 = smul.u32 2, %s36
        %p425 = scmp.eq.s32.totalorder %s37, 0
        // Predicated region
        $region73: #{tpu_custom_call.1} parent=47 // pred_check
          %p426 = pneg %p425
        $region74: #{tpu_custom_call.1} parent=47 // pred_check_branch
          %428 = sbr.rel (%p426) target = $region76
        $region75: #{tpu_custom_call.1} parent=47 // pred_region
          %v429 = vlaneseq
          %vm430 = vcmp.ge.s32.totalorder %v429, 0
          %vm431 = vcmp.lt.s32.totalorder %v429, 256
          %vm432 = vmand %vm430, %vm431
          %433 = vst.msk [vmem:[#allocation3] sm:$0x3] %vm432, -inf
          %434 = vst.msk [vmem:[#allocation4] sm:$0x3] %vm432, 0.0
          %435 = vst [vmem:[#allocation5] sm:$0xff] 0.0
          %436 = vst [vmem:[#allocation5 + $0x8] sm:$0xff] 0.0
          %437 = vst [vmem:[#allocation5 + $0x10] sm:$0xff] 0.0
          %438 = vst [vmem:[#allocation5 + $0x18] sm:$0xff] 0.0
          %v439 = vld [vmem:[%s360] sm:$0xff]
          %v440 = vld [vmem:[%s360 + $0x8] sm:$0xff]
          %v441 = vld [vmem:[%s360 + $0x10] sm:$0xff]
          %v442 = vld [vmem:[%s360 + $0x18] sm:$0xff]
          %v443 = vpack.c.bf16 %v441, %v439
          %v444 = vpack.c.bf16 %v442, %v440
          %v445 = vld [vmem:[#allocation12] sm:$0xf]
          %v446 = vld [vmem:[#allocation13] sm:$0xff]
          %448 = vset.pattern.permute.xlu0 0
          %449 = vperm.xlu0 %448, %v446
          %v450 = vpop.permute.xlu0 %449
          %vm452 = vcmask 130048
          %v454 = vsel %vm452, %v445, 0
          %456 = vmatprep.subr.bf16.mxu0 %v444
          %457 = vmatpush1.bf16.msra.mxu0 %v443
          %458 = vmatprep.subr.bf16.mxu0 0
          %459 = vmatpush1.bf16.msra.mxu0 0
          %460 = vmatprep.subr.bf16.mxu0 0
          %461 = vmatpush1.bf16.msra.mxu0 0
          %462 = vmatprep.subr.bf16.mxu0 0
          %463 = vmatpush1.bf16.msra.mxu0 0
          %464 = vmatprep.subr.bf16.mxu0 0
          %465 = vmatpush1.bf16.msra.mxu0 0
          %466 = vmatprep.subr.bf16.mxu0 0
          %467 = vmatpush1.bf16.msra.mxu0 0
          %468 = vmatprep.subr.bf16.mxu0 0
          %469 = vmatpush1.bf16.msra.mxu0 0
          %470 = vmatprep.subr.bf16.mxu0 0
          %471 = vmatpush1.bf16.msra.mxu0 0
          %472 = vmatprep.subr.bf16.mxu0 0
          %473 = vmatpush1.bf16.msra.mxu0 0
          %474 = vmatprep.subr.bf16.mxu0 0
          %475 = vmatpush1.bf16.msra.mxu0 0
          %476 = vmatprep.subr.bf16.mxu0 0
          %477 = vmatpush1.bf16.msra.mxu0 0
          %478 = vmatprep.subr.bf16.mxu0 0
          %479 = vmatpush1.bf16.msra.mxu0 0
          %480 = vmatprep.subr.bf16.mxu0 0
          %481 = vmatpush1.bf16.msra.mxu0 0
          %482 = vmatprep.subr.bf16.mxu0 0
          %483 = vmatpush1.bf16.msra.mxu0 0
          %484 = vmatprep.subr.bf16.mxu0 0
          %485 = vmatpush1.bf16.msra.mxu0 0
          %486 = vmatprep.subr.bf16.mxu0 0
          %487 = vmatpush1.bf16.msra.mxu0 0
          %488 = vmatprep.mubr.bf16.mxu0 0
          %489 = vmatmul.mubr.bf16.gmra.mrb[0].mxu0 %v454
          %v490 = vpop.f32.mrb[0].mxu0
          %v491 = vadd.f32 %v450, %v490
          %v492 = vpop.f32.mrb[0].mxu0
          %v493 = vadd.f32 %v450, %v492
          %v494 = vpop.f32.mrb[0].mxu0
          %v495 = vpop.f32.mrb[0].mxu0
          %496 = vdwg.mxu0
          %v497 = vpack.c.bf16 %v491, %v491
          %v498 = vpack.c.bf16 %v493, %v493
          %v501 = vunpack.c.l.b16 %v497
          %v502 = vunpack.c.l.b16 %v498
          %v503 = vpack.c.b16 %v502, %v501
          %505 = vst [vmem:[#allocation2] sm:$0xff] %v503
        $region76: #{tpu_custom_call.1} parent=47 // pred_fallthru
          _
        %v506 = vld [vmem:[#allocation15] sm:$0xf]
        %v507 = vld [vmem:[#allocation15 + $0x4] sm:$0xf]
        %v508 = vld [vmem:[#allocation15 + $0x8] sm:$0xf]
        %v509 = vld [vmem:[%s369] sm:$0xff]
        %v510 = vld [vmem:[%s369 + $0x8] sm:$0xff]
        %v511 = vld [vmem:[#allocation16] sm:$0xff]
        %v512 = vld [vmem:[#allocation16 + $0x8] sm:$0xff]
        %v513 = vld [vmem:[#allocation16 + $0x10] sm:$0xff]
        %515 = vset.pattern.permute.xlu0 0
        %516 = vperm.xlu0 %515, %v511
        %v517 = vpop.permute.xlu0 %516
        %520 = vset.pattern.permute.xlu0 0
        %521 = vperm.xlu0 %520, %v512
        %v522 = vpop.permute.xlu0 %521
        %525 = vset.pattern.permute.xlu0 0
        %526 = vperm.xlu0 %525, %v513
        %v527 = vpop.permute.xlu0 %526
        %v532 = vunpack.c.l.b16 %v506
        %v533 = vunpack.c.l.b16 %v507
        %v534 = vunpack.c.l.b16 %v508
        %v535 = vpack.c.b16 %v533, %v532
        %v536 = vpack.c.b16 %v534, %v534
        %v539 = vunpack.c.l.b16 %v509
        %v540 = vunpack.c.h.b16 %v509
        %v541 = vunpack.c.l.b16 %v510
        %v542 = vunpack.c.h.b16 %v510
        %v543 = vpack.c.b16 %v541, %v539
        %v544 = vpack.c.b16 %v542, %v540
        %vm547 = vcmask 130048
        %v549 = vsel %vm547, %v535, 0
        %v552 = vsel %vm547, %v536, 0
        %554 = vmatprep.subr.bf16.mxu0 %v544
        %555 = vmatpush1.bf16.msra.mxu0 %v543
        %556 = vmatprep.subr.bf16.mxu0 0
        %557 = vmatpush1.bf16.msra.mxu0 0
        %558 = vmatprep.subr.bf16.mxu0 0
        %559 = vmatpush1.bf16.msra.mxu0 0
        %560 = vmatprep.subr.bf16.mxu0 0
        %561 = vmatpush1.bf16.msra.mxu0 0
        %562 = vmatprep.subr.bf16.mxu0 0
        %563 = vmatpush1.bf16.msra.mxu0 0
        %564 = vmatprep.subr.bf16.mxu0 0
        %565 = vmatpush1.bf16.msra.mxu0 0
        %566 = vmatprep.subr.bf16.mxu0 0
        %567 = vmatpush1.bf16.msra.mxu0 0
        %568 = vmatprep.subr.bf16.mxu0 0
        %569 = vmatpush1.bf16.msra.mxu0 0
        %570 = vmatprep.subr.bf16.mxu0 0
        %571 = vmatpush1.bf16.msra.mxu0 0
        %572 = vmatprep.subr.bf16.mxu0 0
        %573 = vmatpush1.bf16.msra.mxu0 0
        %574 = vmatprep.subr.bf16.mxu0 0
        %575 = vmatpush1.bf16.msra.mxu0 0
        %576 = vmatprep.subr.bf16.mxu0 0
        %577 = vmatpush1.bf16.msra.mxu0 0
        %578 = vmatprep.subr.bf16.mxu0 0
        %579 = vmatpush1.bf16.msra.mxu0 0
        %580 = vmatprep.subr.bf16.mxu0 0
        %581 = vmatpush1.bf16.msra.mxu0 0
        %582 = vmatprep.subr.bf16.mxu0 0
        %583 = vmatpush1.bf16.msra.mxu0 0
        %584 = vmatprep.subr.bf16.mxu0 0
        %585 = vmatpush1.bf16.msra.mxu0 0
        %586 = vmatprep.mubr.bf16.mxu0 0
        %587 = vmatmul.mubr.bf16.gmra.mrb[0].mxu0 %v549
        %v588 = vpop.f32.mrb[0].mxu0
        %v589 = vadd.f32 %v517, %v588
        %v590 = vpop.f32.mrb[0].mxu0
        %v591 = vadd.f32 %v517, %v590
        %v592 = vpop.f32.mrb[0].mxu0
        %v593 = vadd.f32 %v522, %v592
        %v594 = vpop.f32.mrb[0].mxu0
        %v595 = vadd.f32 %v522, %v594
        %596 = vmatprep.mubr.bf16.mxu0 0
        %597 = vmatmul.mubr.bf16.gmra.mrb[0].mxu0 %v552
        %v598 = vpop.f32.mrb[0].mxu0
        %v599 = vadd.f32 %v527, %v598
        %v600 = vpop.f32.mrb[0].mxu0
        %v601 = vadd.f32 %v527, %v600
        %v602 = vpop.f32.mrb[0].mxu0
        %v603 = vpop.f32.mrb[0].mxu0
        %604 = vdwg.mxu0
        %v605 = vpack.c.bf16 %v589, %v589
        %v606 = vpack.c.bf16 %v591, %v591
        %v607 = vpack.c.bf16 %v599, %v593
        %v608 = vpack.c.bf16 %v601, %v595
        %v609 = vld [vmem:[#allocation2] sm:$0xff]
        %610 = vxpose.xlu0.c.b16.start [1/8] %v605, 128
        %611 = vxpose.xlu0.c.b16.cont [2/8] 0, 128
        %612 = vxpose.xlu0.c.b16.cont [3/8] 0, 128
        %613 = vxpose.xlu0.c.b16.cont [4/8] 0, 128
        %614 = vxpose.xlu0.c.b16.cont [5/8] 0, 128
        %615 = vxpose.xlu0.c.b16.cont [6/8] 0, 128
        %616 = vxpose.xlu0.c.b16.cont [7/8] 0, 128
        %617 = vxpose.xlu0.c.b16.end [8/8] 0, 128
        %v618 = vpop.trf.xlu0
        %v619 = vpop.trf.xlu0
        %v620 = vpop.trf.xlu0
        %v621 = vpop.trf.xlu0
        %v622 = vpop.trf.xlu0
        %v623 = vpop.trf.xlu0
        %v624 = vpop.trf.xlu0
        %v625 = vpop.trf.xlu0
        %626 = vxpose.xlu0.c.b16.start [1/8] %v606, 128
        %627 = vxpose.xlu0.c.b16.cont [2/8] 0, 128
        %628 = vxpose.xlu0.c.b16.cont [3/8] 0, 128
        %629 = vxpose.xlu0.c.b16.cont [4/8] 0, 128
        %630 = vxpose.xlu0.c.b16.cont [5/8] 0, 128
        %631 = vxpose.xlu0.c.b16.cont [6/8] 0, 128
        %632 = vxpose.xlu0.c.b16.cont [7/8] 0, 128
        %633 = vxpose.xlu0.c.b16.end [8/8] 0, 128
        %v634 = vpop.trf.xlu0
        %v635 = vpop.trf.xlu0
        %v636 = vpop.trf.xlu0
        %v637 = vpop.trf.xlu0
        %v638 = vpop.trf.xlu0
        %v639 = vpop.trf.xlu0
        %v640 = vpop.trf.xlu0
        %v641 = vpop.trf.xlu0
        %v643 = vunpack.c.l.b16 %v609
        %v644 = vunpack.c.h.b16 %v609
        %v645 = vpack.c.b16 %v643, %v643
        %v646 = vpack.c.b16 %v644, %v644
        %vm647 = vcmask 64512
        %v649 = vsel %vm647, %v618, 0
        %v652 = vsel %vm647, %v619, 0
        %v655 = vsel %vm647, %v620, 0
        %v658 = vsel %vm647, %v621, 0
        %v661 = vsel %vm647, %v622, 0
        %v664 = vsel %vm647, %v623, 0
        %v667 = vsel %vm647, %v624, 0
        %v670 = vsel %vm647, %v625, 0
        %v673 = vsel %vm647, %v634, 0
        %v676 = vsel %vm647, %v635, 0
        %v679 = vsel %vm647, %v636, 0
        %v682 = vsel %vm647, %v637, 0
        %v685 = vsel %vm647, %v638, 0
        %v688 = vsel %vm647, %v639, 0
        %v691 = vsel %vm647, %v640, 0
        %v694 = vsel %vm647, %v641, 0
        %vm696 = vcmask 1043456
        %v698 = vsel %vm696, %v645, 0
        %v701 = vsel %vm696, %v646, 0
        %703 = vmatprep.subr.bf16.mxu0 %v701
        %704 = vmatpush1.bf16.msra.mxu0 %v698
        %705 = vmatprep.subr.bf16.mxu0 0
        %706 = vmatpush1.bf16.msra.mxu0 0
        %707 = vmatprep.subr.bf16.mxu0 0
        %708 = vmatpush1.bf16.msra.mxu0 0
        %709 = vmatprep.subr.bf16.mxu0 0
        %710 = vmatpush1.bf16.msra.mxu0 0
        %711 = vmatprep.subr.bf16.mxu0 0
        %712 = vmatpush1.bf16.msra.mxu0 0
        %713 = vmatprep.subr.bf16.mxu0 0
        %714 = vmatpush1.bf16.msra.mxu0 0
        %715 = vmatprep.subr.bf16.mxu0 0
        %716 = vmatpush1.bf16.msra.mxu0 0
        %717 = vmatprep.subr.bf16.mxu0 0
        %718 = vmatpush1.bf16.msra.mxu0 0
        %719 = vmatprep.subr.bf16.mxu0 0
        %720 = vmatpush1.bf16.msra.mxu0 0
        %721 = vmatprep.subr.bf16.mxu0 0
        %722 = vmatpush1.bf16.msra.mxu0 0
        %723 = vmatprep.subr.bf16.mxu0 0
        %724 = vmatpush1.bf16.msra.mxu0 0
        %725 = vmatprep.subr.bf16.mxu0 0
        %726 = vmatpush1.bf16.msra.mxu0 0
        %727 = vmatprep.subr.bf16.mxu0 0
        %728 = vmatpush1.bf16.msra.mxu0 0
        %729 = vmatprep.subr.bf16.mxu0 0
        %730 = vmatpush1.bf16.msra.mxu0 0
        %731 = vmatprep.subr.bf16.mxu0 0
        %732 = vmatpush1.bf16.msra.mxu0 0
        %733 = vmatprep.subr.bf16.mxu0 0
        %734 = vmatpush1.bf16.msra.mxu0 0
        %735 = vmatprep.mubr.bf16.mxu0 0
        %736 = vmatmul.mubr.bf16.gmra.mrb[0].mxu0 %v649
        %v737 = vpop.f32.mrb[0].mxu0
        %v738 = vadd.f32 0.0, %v737
        %v739 = vpop.f32.mrb[0].mxu0
        %v740 = vadd.f32 0.0, %v739
        %v741 = vpop.f32.mrb[0].mxu0
        %v742 = vadd.f32 0.0, %v741
        %v743 = vpop.f32.mrb[0].mxu0
        %v744 = vadd.f32 0.0, %v743
        %745 = vmatprep.mubr.bf16.mxu0 0
        %746 = vmatmul.mubr.bf16.gmra.mrb[0].mxu0 %v652
        %v747 = vpop.f32.mrb[0].mxu0
        %v748 = vadd.f32 0.0, %v747
        %v749 = vpop.f32.mrb[0].mxu0
        %v750 = vadd.f32 0.0, %v749
        %v751 = vpop.f32.mrb[0].mxu0
        %v752 = vadd.f32 0.0, %v751
        %v753 = vpop.f32.mrb[0].mxu0
        %v754 = vadd.f32 0.0, %v753
        %755 = vmatprep.mubr.bf16.mxu0 0
        %756 = vmatmul.mubr.bf16.gmra.mrb[0].mxu0 %v655
        %v757 = vpop.f32.mrb[0].mxu0
        %v758 = vadd.f32 0.0, %v757
        %v759 = vpop.f32.mrb[0].mxu0
        %v760 = vadd.f32 0.0, %v759
        %v761 = vpop.f32.mrb[0].mxu0
        %v762 = vadd.f32 0.0, %v761
        %v763 = vpop.f32.mrb[0].mxu0
        %v764 = vadd.f32 0.0, %v763
        %765 = vmatprep.mubr.bf16.mxu0 0
        %766 = vmatmul.mubr.bf16.gmra.mrb[0].mxu0 %v658
        %v767 = vpop.f32.mrb[0].mxu0
        %v768 = vadd.f32 0.0, %v767
        %v769 = vpop.f32.mrb[0].mxu0
        %v770 = vadd.f32 0.0, %v769
        %v771 = vpop.f32.mrb[0].mxu0
        %v772 = vadd.f32 0.0, %v771
        %v773 = vpop.f32.mrb[0].mxu0
        %v774 = vadd.f32 0.0, %v773
        %775 = vmatprep.mubr.bf16.mxu0 0
        %776 = vmatmul.mubr.bf16.gmra.mrb[0].mxu0 %v661
        %v777 = vpop.f32.mrb[0].mxu0
        %v778 = vadd.f32 0.0, %v777
        %v779 = vpop.f32.mrb[0].mxu0
        %v780 = vadd.f32 0.0, %v779
        %v781 = vpop.f32.mrb[0].mxu0
        %v782 = vadd.f32 0.0, %v781
        %v783 = vpop.f32.mrb[0].mxu0
        %v784 = vadd.f32 0.0, %v783
        %785 = vmatprep.mubr.bf16.mxu0 0
        %786 = vmatmul.mubr.bf16.gmra.mrb[0].mxu0 %v664
        %v787 = vpop.f32.mrb[0].mxu0
        %v788 = vadd.f32 0.0, %v787
        %v789 = vpop.f32.mrb[0].mxu0
        %v790 = vadd.f32 0.0, %v789
        %v791 = vpop.f32.mrb[0].mxu0
        %v792 = vadd.f32 0.0, %v791
        %v793 = vpop.f32.mrb[0].mxu0
        %v794 = vadd.f32 0.0, %v793
        %795 = vmatprep.mubr.bf16.mxu0 0
        %796 = vmatmul.mubr.bf16.gmra.mrb[0].mxu0 %v667
        %v797 = vpop.f32.mrb[0].mxu0
        %v798 = vadd.f32 0.0, %v797
        %v799 = vpop.f32.mrb[0].mxu0
        %v800 = vadd.f32 0.0, %v799
        %v801 = vpop.f32.mrb[0].mxu0
        %v802 = vadd.f32 0.0, %v801
        %v803 = vpop.f32.mrb[0].mxu0
        %v804 = vadd.f32 0.0, %v803
        %805 = vmatprep.mubr.bf16.mxu0 0
        %806 = vmatmul.mubr.bf16.gmra.mrb[0].mxu0 %v670
        %v807 = vpop.f32.mrb[0].mxu0
        %v808 = vadd.f32 0.0, %v807
        %v809 = vpop.f32.mrb[0].mxu0
        %v810 = vadd.f32 0.0, %v809
        %v811 = vpop.f32.mrb[0].mxu0
        %v812 = vadd.f32 0.0, %v811
        %v813 = vpop.f32.mrb[0].mxu0
        %v814 = vadd.f32 0.0, %v813
        %815 = vmatprep.mubr.bf16.mxu0 0
        %816 = vmatmul.mubr.bf16.gmra.mrb[0].mxu0 %v673
        %v817 = vpop.f32.mrb[0].mxu0
        %v818 = vadd.f32 0.0, %v817
        %v819 = vpop.f32.mrb[0].mxu0
        %v820 = vadd.f32 0.0, %v819
        %v821 = vpop.f32.mrb[0].mxu0
        %v822 = vadd.f32 0.0, %v821
        %v823 = vpop.f32.mrb[0].mxu0
        %v824 = vadd.f32 0.0, %v823
        %825 = vmatprep.mubr.bf16.mxu0 0
        %826 = vmatmul.mubr.bf16.gmra.mrb[0].mxu0 %v676
        %v827 = vpop.f32.mrb[0].mxu0
        %v828 = vadd.f32 0.0, %v827
        %v829 = vpop.f32.mrb[0].mxu0
        %v830 = vadd.f32 0.0, %v829
        %v831 = vpop.f32.mrb[0].mxu0
        %v832 = vadd.f32 0.0, %v831
        %v833 = vpop.f32.mrb[0].mxu0
        %v834 = vadd.f32 0.0, %v833
        %835 = vmatprep.mubr.bf16.mxu0 0
        %836 = vmatmul.mubr.bf16.gmra.mrb[0].mxu0 %v679
        %v837 = vpop.f32.mrb[0].mxu0
        %v838 = vadd.f32 0.0, %v837
        %v839 = vpop.f32.mrb[0].mxu0
        %v840 = vadd.f32 0.0, %v839
        %v841 = vpop.f32.mrb[0].mxu0
        %v842 = vadd.f32 0.0, %v841
        %v843 = vpop.f32.mrb[0].mxu0
        %v844 = vadd.f32 0.0, %v843
        %845 = vmatprep.mubr.bf16.mxu0 0
        %846 = vmatmul.mubr.bf16.gmra.mrb[0].mxu0 %v682
        %v847 = vpop.f32.mrb[0].mxu0
        %v848 = vadd.f32 0.0, %v847
        %v849 = vpop.f32.mrb[0].mxu0
        %v850 = vadd.f32 0.0, %v849
        %v851 = vpop.f32.mrb[0].mxu0
        %v852 = vadd.f32 0.0, %v851
        %v853 = vpop.f32.mrb[0].mxu0
        %v854 = vadd.f32 0.0, %v853
        %855 = vmatprep.mubr.bf16.mxu0 0
        %856 = vmatmul.mubr.bf16.gmra.mrb[0].mxu0 %v685
        %v857 = vpop.f32.mrb[0].mxu0
        %v858 = vadd.f32 0.0, %v857
        %v859 = vpop.f32.mrb[0].mxu0
        %v860 = vadd.f32 0.0, %v859
        %v861 = vpop.f32.mrb[0].mxu0
        %v862 = vadd.f32 0.0, %v861
        %v863 = vpop.f32.mrb[0].mxu0
        %v864 = vadd.f32 0.0, %v863
        %865 = vmatprep.mubr.bf16.mxu0 0
        %866 = vmatmul.mubr.bf16.gmra.mrb[0].mxu0 %v688
        %v867 = vpop.f32.mrb[0].mxu0
        %v868 = vadd.f32 0.0, %v867
        %v869 = vpop.f32.mrb[0].mxu0
        %v870 = vadd.f32 0.0, %v869
        %v871 = vpop.f32.mrb[0].mxu0
        %v872 = vadd.f32 0.0, %v871
        %v873 = vpop.f32.mrb[0].mxu0
        %v874 = vadd.f32 0.0, %v873
        %875 = vmatprep.mubr.bf16.mxu0 0
        %876 = vmatmul.mubr.bf16.gmra.mrb[0].mxu0 %v691
        %v877 = vpop.f32.mrb[0].mxu0
        %v878 = vadd.f32 0.0, %v877
        %v879 = vpop.f32.mrb[0].mxu0
        %v880 = vadd.f32 0.0, %v879
        %v881 = vpop.f32.mrb[0].mxu0
        %v882 = vadd.f32 0.0, %v881
        %v883 = vpop.f32.mrb[0].mxu0
        %v884 = vadd.f32 0.0, %v883
        %885 = vmatprep.mubr.bf16.mxu0 0
        %886 = vmatmul.mubr.bf16.gmra.mrb[0].mxu0 %v694
        %v887 = vpop.f32.mrb[0].mxu0
        %v888 = vadd.f32 0.0, %v887
        %v889 = vpop.f32.mrb[0].mxu0
        %v890 = vadd.f32 0.0, %v889
        %v891 = vpop.f32.mrb[0].mxu0
        %v892 = vadd.f32 0.0, %v891
        %v893 = vpop.f32.mrb[0].mxu0
        %v894 = vadd.f32 0.0, %v893
        %895 = vdwg.mxu0
        %v896 = vld [vmem:[#allocation3] sm:$0x3]
        %v897 = vmax.f32 %v738, %v748
        %v898 = vmax.f32 %v742, %v752
        %v899 = vmax.f32 %v897, %v758
        %v900 = vmax.f32 %v898, %v762
        %v901 = vmax.f32 %v899, %v768
        %v902 = vmax.f32 %v900, %v772
        %v903 = vmax.f32 %v901, %v778
        %v904 = vmax.f32 %v902, %v782
        %v905 = vmax.f32 %v903, %v788
        %v906 = vmax.f32 %v904, %v792
        %v907 = vmax.f32 %v905, %v798
        %v908 = vmax.f32 %v906, %v802
        %v909 = vmax.f32 %v907, %v808
        %v910 = vmax.f32 %v908, %v812
        %v911 = vmax.f32 %v909, %v818
        %v912 = vmax.f32 %v910, %v822
        %v913 = vmax.f32 %v911, %v828
        %v914 = vmax.f32 %v912, %v832
        %v915 = vmax.f32 %v913, %v838
        %v916 = vmax.f32 %v914, %v842
        %v917 = vmax.f32 %v915, %v848
        %v918 = vmax.f32 %v916, %v852
        %v919 = vmax.f32 %v917, %v858
        %v920 = vmax.f32 %v918, %v862
        %v921 = vmax.f32 %v919, %v868
        %v922 = vmax.f32 %v920, %v872
        %v923 = vmax.f32 %v921, %v878
        %v924 = vmax.f32 %v922, %v882
        %v925 = vmax.f32 %v923, %v888
        %v926 = vmax.f32 %v924, %v892
        %v927 = vmax.f32 %v925, %v926
        %v928 = vrot.slane %v927, 4
        %v929 = vmax.f32 %v927, %v928
        %v930 = vrot.slane %v929, 2
        %v931 = vmax.f32 %v929, %v930
        %v932 = vrot.slane %v931, 1
        %v933 = vmax.f32 %v931, %v932
        %v934 = vmax.f32 %v740, %v750
        %v935 = vmax.f32 %v744, %v754
        %v936 = vmax.f32 %v934, %v760
        %v937 = vmax.f32 %v935, %v764
        %v938 = vmax.f32 %v936, %v770
        %v939 = vmax.f32 %v937, %v774
        %v940 = vmax.f32 %v938, %v780
        %v941 = vmax.f32 %v939, %v784
        %v942 = vmax.f32 %v940, %v790
        %v943 = vmax.f32 %v941, %v794
        %v944 = vmax.f32 %v942, %v800
        %v945 = vmax.f32 %v943, %v804
        %v946 = vmax.f32 %v944, %v810
        %v947 = vmax.f32 %v945, %v814
        %v948 = vmax.f32 %v946, %v820
        %v949 = vmax.f32 %v947, %v824
        %v950 = vmax.f32 %v948, %v830
        %v951 = vmax.f32 %v949, %v834
        %v952 = vmax.f32 %v950, %v840
        %v953 = vmax.f32 %v951, %v844
        %v954 = vmax.f32 %v952, %v850
        %v955 = vmax.f32 %v953, %v854
        %v956 = vmax.f32 %v954, %v860
        %v957 = vmax.f32 %v955, %v864
        %v958 = vmax.f32 %v956, %v870
        %v959 = vmax.f32 %v957, %v874
        %v960 = vmax.f32 %v958, %v880
        %v961 = vmax.f32 %v959, %v884
        %v962 = vmax.f32 %v960, %v890
        %v963 = vmax.f32 %v961, %v894
        %v964 = vmax.f32 %v962, %v963
        %v965 = vrot.slane %v964, 4
        %v966 = vmax.f32 %v964, %v965
        %v967 = vrot.slane %v966, 2
        %v968 = vmax.f32 %v966, %v967
        %v969 = vrot.slane %v968, 1
        %v970 = vmax.f32 %v968, %v969
        %v973 = vcombine.low %v933, %v970
        %v975 = vunpack.c.l.s4 1966171168
        %v976 = vunpack.c.0.s8 %v975
        %v977 = vlaneseq
        %v978 = vshrl.u32 %v977, 7
        %v979 = vsub.s32 %v976, %v978
        %v980 = vrot.slane %v973, %v979
        %v982 = vunpack.c.l.s4 1966171168
        %v983 = vunpack.c.0.s8 %v982
        %v984 = vlaneseq
        %v985 = vshrl.u32 %v984, 7
        %v986 = vsub.s32 %v983, %v985
        %v987 = vrot.slane %v980, %v986
        %v989 = vmax.f32 %v896, %v987
        %v990 = vsub.f32 %v896, %v989
        %v991 = vmul.f32 %v990, 1.442695
        %v992 = vpow.pop %v991
        %v994 = vlaneseq
        %v995 = vshrl.u32 %v994, 7
        %v996 = vsub.s32 0, %v995
        %v997 = vrot.slane %v989, %v996
        %v998 = vlaneseq
        %v999 = vshrl.u32 %v998, 7
        %v1000 = vsub.s32 1, %v999
        %v1001 = vrot.slane %v989, %v1000
        %v1004 = vsub.f32 %v738, %v997
        %v1005 = vsub.f32 %v740, %v1001
        %v1006 = vsub.f32 %v742, %v997
        %v1007 = vsub.f32 %v744, %v1001
        %v1008 = vsub.f32 %v748, %v997
        %v1009 = vsub.f32 %v750, %v1001
        %v1010 = vsub.f32 %v752, %v997
        %v1011 = vsub.f32 %v754, %v1001
        %v1012 = vsub.f32 %v758, %v997
        %v1013 = vsub.f32 %v760, %v1001
        %v1014 = vsub.f32 %v762, %v997
        %v1015 = vsub.f32 %v764, %v1001
        %v1016 = vsub.f32 %v768, %v997
        %v1017 = vsub.f32 %v770, %v1001
        %v1018 = vsub.f32 %v772, %v997
        %v1019 = vsub.f32 %v774, %v1001
        %v1020 = vsub.f32 %v778, %v997
        %v1021 = vsub.f32 %v780, %v1001
        %v1022 = vsub.f32 %v782, %v997
        %v1023 = vsub.f32 %v784, %v1001
        %v1024 = vsub.f32 %v788, %v997
        %v1025 = vsub.f32 %v790, %v1001
        %v1026 = vsub.f32 %v792, %v997
        %v1027 = vsub.f32 %v794, %v1001
        %v1028 = vsub.f32 %v798, %v997
        %v1029 = vsub.f32 %v800, %v1001
        %v1030 = vsub.f32 %v802, %v997
        %v1031 = vsub.f32 %v804, %v1001
        %v1032 = vsub.f32 %v808, %v997
        %v1033 = vsub.f32 %v810, %v1001
        %v1034 = vsub.f32 %v812, %v997
        %v1035 = vsub.f32 %v814, %v1001
        %v1036 = vsub.f32 %v818, %v997
        %v1037 = vsub.f32 %v820, %v1001
        %v1038 = vsub.f32 %v822, %v997
        %v1039 = vsub.f32 %v824, %v1001
        %v1040 = vsub.f32 %v828, %v997
        %v1041 = vsub.f32 %v830, %v1001
        %v1042 = vsub.f32 %v832, %v997
        %v1043 = vsub.f32 %v834, %v1001
        %v1044 = vsub.f32 %v838, %v997
        %v1045 = vsub.f32 %v840, %v1001
        %v1046 = vsub.f32 %v842, %v997
        %v1047 = vsub.f32 %v844, %v1001
        %v1048 = vsub.f32 %v848, %v997
        %v1049 = vsub.f32 %v850, %v1001
        %v1050 = vsub.f32 %v852, %v997
        %v1051 = vsub.f32 %v854, %v1001
        %v1052 = vsub.f32 %v858, %v997
        %v1053 = vsub.f32 %v860, %v1001
        %v1054 = vsub.f32 %v862, %v997
        %v1055 = vsub.f32 %v864, %v1001
        %v1056 = vsub.f32 %v868, %v997
        %v1057 = vsub.f32 %v870, %v1001
        %v1058 = vsub.f32 %v872, %v997
        %v1059 = vsub.f32 %v874, %v1001
        %v1060 = vsub.f32 %v878, %v997
        %v1061 = vsub.f32 %v880, %v1001
        %v1062 = vsub.f32 %v882, %v997
        %v1063 = vsub.f32 %v884, %v1001
        %v1064 = vsub.f32 %v888, %v997
        %v1065 = vsub.f32 %v890, %v1001
        %v1066 = vsub.f32 %v892, %v997
        %v1067 = vsub.f32 %v894, %v1001
        %v1068 = vmul.f32 %v1004, 1.442695
        %v1069 = vpow.pop %v1068
        %v1070 = vmul.f32 %v1005, 1.442695
        %v1071 = vpow.pop %v1070
        %v1072 = vmul.f32 %v1006, 1.442695
        %v1073 = vpow.pop %v1072
        %v1074 = vmul.f32 %v1007, 1.442695
        %v1075 = vpow.pop %v1074
        %v1076 = vmul.f32 %v1008, 1.442695
        %v1077 = vpow.pop %v1076
        %v1078 = vmul.f32 %v1009, 1.442695
        %v1079 = vpow.pop %v1078
        %v1080 = vmul.f32 %v1010, 1.442695
        %v1081 = vpow.pop %v1080
        %v1082 = vmul.f32 %v1011, 1.442695
        %v1083 = vpow.pop %v1082
        %v1084 = vmul.f32 %v1012, 1.442695
        %v1085 = vpow.pop %v1084
        %v1086 = vmul.f32 %v1013, 1.442695
        %v1087 = vpow.pop %v1086
        %v1088 = vmul.f32 %v1014, 1.442695
        %v1089 = vpow.pop %v1088
        %v1090 = vmul.f32 %v1015, 1.442695
        %v1091 = vpow.pop %v1090
        %v1092 = vmul.f32 %v1016, 1.442695
        %v1093 = vpow.pop %v1092
        %v1094 = vmul.f32 %v1017, 1.442695
        %v1095 = vpow.pop %v1094
        %v1096 = vmul.f32 %v1018, 1.442695
        %v1097 = vpow.pop %v1096
        %v1098 = vmul.f32 %v1019, 1.442695
        %v1099 = vpow.pop %v1098
        %v1100 = vmul.f32 %v1020, 1.442695
        %v1101 = vpow.pop %v1100
        %v1102 = vmul.f32 %v1021, 1.442695
        %v1103 = vpow.pop %v1102
        %v1104 = vmul.f32 %v1022, 1.442695
        %v1105 = vpow.pop %v1104
        %v1106 = vmul.f32 %v1023, 1.442695
        %v1107 = vpow.pop %v1106
        %v1108 = vmul.f32 %v1024, 1.442695
        %v1109 = vpow.pop %v1108
        %v1110 = vmul.f32 %v1025, 1.442695
        %v1111 = vpow.pop %v1110
        %v1112 = vmul.f32 %v1026, 1.442695
        %v1113 = vpow.pop %v1112
        %v1114 = vmul.f32 %v1027, 1.442695
        %v1115 = vpow.pop %v1114
        %v1116 = vmul.f32 %v1028, 1.442695
        %v1117 = vpow.pop %v1116
        %v1118 = vmul.f32 %v1029, 1.442695
        %v1119 = vpow.pop %v1118
        %v1120 = vmul.f32 %v1030, 1.442695
        %v1121 = vpow.pop %v1120
        %v1122 = vmul.f32 %v1031, 1.442695
        %v1123 = vpow.pop %v1122
        %v1124 = vmul.f32 %v1032, 1.442695
        %v1125 = vpow.pop %v1124
        %v1126 = vmul.f32 %v1033, 1.442695
        %v1127 = vpow.pop %v1126
        %v1128 = vmul.f32 %v1034, 1.442695
        %v1129 = vpow.pop %v1128
        %v1130 = vmul.f32 %v1035, 1.442695
        %v1131 = vpow.pop %v1130
        %v1132 = vmul.f32 %v1036, 1.442695
        %v1133 = vpow.pop %v1132
        %v1134 = vmul.f32 %v1037, 1.442695
        %v1135 = vpow.pop %v1134
        %v1136 = vmul.f32 %v1038, 1.442695
        %v1137 = vpow.pop %v1136
        %v1138 = vmul.f32 %v1039, 1.442695
        %v1139 = vpow.pop %v1138
        %v1140 = vmul.f32 %v1040, 1.442695
        %v1141 = vpow.pop %v1140
        %v1142 = vmul.f32 %v1041, 1.442695
        %v1143 = vpow.pop %v1142
        %v1144 = vmul.f32 %v1042, 1.442695
        %v1145 = vpow.pop %v1144
        %v1146 = vmul.f32 %v1043, 1.442695
        %v1147 = vpow.pop %v1146
        %v1148 = vmul.f32 %v1044, 1.442695
        %v1149 = vpow.pop %v1148
        %v1150 = vmul.f32 %v1045, 1.442695
        %v1151 = vpow.pop %v1150
        %v1152 = vmul.f32 %v1046, 1.442695
        %v1153 = vpow.pop %v1152
        %v1154 = vmul.f32 %v1047, 1.442695
        %v1155 = vpow.pop %v1154
        %v1156 = vmul.f32 %v1048, 1.442695
        %v1157 = vpow.pop %v1156
        %v1158 = vmul.f32 %v1049, 1.442695
        %v1159 = vpow.pop %v1158
        %v1160 = vmul.f32 %v1050, 1.442695
        %v1161 = vpow.pop %v1160
        %v1162 = vmul.f32 %v1051, 1.442695
        %v1163 = vpow.pop %v1162
        %v1164 = vmul.f32 %v1052, 1.442695
        %v1165 = vpow.pop %v1164
        %v1166 = vmul.f32 %v1053, 1.442695
        %v1167 = vpow.pop %v1166
        %v1168 = vmul.f32 %v1054, 1.442695
        %v1169 = vpow.pop %v1168
        %v1170 = vmul.f32 %v1055, 1.442695
        %v1171 = vpow.pop %v1170
        %v1172 = vmul.f32 %v1056, 1.442695
        %v1173 = vpow.pop %v1172
        %v1174 = vmul.f32 %v1057, 1.442695
        %v1175 = vpow.pop %v1174
        %v1176 = vmul.f32 %v1058, 1.442695
        %v1177 = vpow.pop %v1176
        %v1178 = vmul.f32 %v1059, 1.442695
        %v1179 = vpow.pop %v1178
        %v1180 = vmul.f32 %v1060, 1.442695
        %v1181 = vpow.pop %v1180
        %v1182 = vmul.f32 %v1061, 1.442695
        %v1183 = vpow.pop %v1182
        %v1184 = vmul.f32 %v1062, 1.442695
        %v1185 = vpow.pop %v1184
        %v1186 = vmul.f32 %v1063, 1.442695
        %v1187 = vpow.pop %v1186
        %v1188 = vmul.f32 %v1064, 1.442695
        %v1189 = vpow.pop %v1188
        %v1190 = vmul.f32 %v1065, 1.442695
        %v1191 = vpow.pop %v1190
        %v1192 = vmul.f32 %v1066, 1.442695
        %v1193 = vpow.pop %v1192
        %v1194 = vmul.f32 %v1067, 1.442695
        %v1195 = vpow.pop %v1194
        %v1196 = vld [vmem:[#allocation4] sm:$0x3]
        %v1197 = vmul.f32 %v992, %v1196
        %v1198 = vadd.f32 %v1069, %v1073
        %v1199 = vadd.f32 %v1198, %v1077
        %v1200 = vadd.f32 %v1199, %v1081
        %v1201 = vadd.f32 %v1200, %v1085
        %v1202 = vadd.f32 %v1201, %v1089
        %v1203 = vadd.f32 %v1202, %v1093
        %v1204 = vadd.f32 %v1203, %v1097
        %v1205 = vadd.f32 %v1204, %v1101
        %v1206 = vadd.f32 %v1205, %v1105
        %v1207 = vadd.f32 %v1206, %v1109
        %v1208 = vadd.f32 %v1207, %v1113
        %v1209 = vadd.f32 %v1208, %v1117
        %v1210 = vadd.f32 %v1209, %v1121
        %v1211 = vadd.f32 %v1210, %v1125
        %v1212 = vadd.f32 %v1211, %v1129
        %v1213 = vadd.f32 %v1212, %v1133
        %v1214 = vadd.f32 %v1213, %v1137
        %v1215 = vadd.f32 %v1214, %v1141
        %v1216 = vadd.f32 %v1215, %v1145
        %v1217 = vadd.f32 %v1216, %v1149
        %v1218 = vadd.f32 %v1217, %v1153
        %v1219 = vadd.f32 %v1218, %v1157
        %v1220 = vadd.f32 %v1219, %v1161
        %v1221 = vadd.f32 %v1220, %v1165
        %v1222 = vadd.f32 %v1221, %v1169
        %v1223 = vadd.f32 %v1222, %v1173
        %v1224 = vadd.f32 %v1223, %v1177
        %v1225 = vadd.f32 %v1224, %v1181
        %v1226 = vadd.f32 %v1225, %v1185
        %v1227 = vadd.f32 %v1226, %v1189
        %v1228 = vadd.f32 %v1227, %v1193
        %v1229 = vrot.slane %v1228, 4
        %v1230 = vadd.f32 %v1228, %v1229
        %v1231 = vrot.slane %v1230, 2
        %v1232 = vadd.f32 %v1230, %v1231
        %v1233 = vrot.slane %v1232, 1
        %v1234 = vadd.f32 %v1232, %v1233
        %v1235 = vadd.f32 %v1071, %v1075
        %v1236 = vadd.f32 %v1235, %v1079
        %v1237 = vadd.f32 %v1236, %v1083
        %v1238 = vadd.f32 %v1237, %v1087
        %v1239 = vadd.f32 %v1238, %v1091
        %v1240 = vadd.f32 %v1239, %v1095
        %v1241 = vadd.f32 %v1240, %v1099
        %v1242 = vadd.f32 %v1241, %v1103
        %v1243 = vadd.f32 %v1242, %v1107
        %v1244 = vadd.f32 %v1243, %v1111
        %v1245 = vadd.f32 %v1244, %v1115
        %v1246 = vadd.f32 %v1245, %v1119
        %v1247 = vadd.f32 %v1246, %v1123
        %v1248 = vadd.f32 %v1247, %v1127
        %v1249 = vadd.f32 %v1248, %v1131
        %v1250 = vadd.f32 %v1249, %v1135
        %v1251 = vadd.f32 %v1250, %v1139
        %v1252 = vadd.f32 %v1251, %v1143
        %v1253 = vadd.f32 %v1252, %v1147
        %v1254 = vadd.f32 %v1253, %v1151
        %v1255 = vadd.f32 %v1254, %v1155
        %v1256 = vadd.f32 %v1255, %v1159
        %v1257 = vadd.f32 %v1256, %v1163
        %v1258 = vadd.f32 %v1257, %v1167
        %v1259 = vadd.f32 %v1258, %v1171
        %v1260 = vadd.f32 %v1259, %v1175
        %v1261 = vadd.f32 %v1260, %v1179
        %v1262 = vadd.f32 %v1261, %v1183
        %v1263 = vadd.f32 %v1262, %v1187
        %v1264 = vadd.f32 %v1263, %v1191
        %v1265 = vadd.f32 %v1264, %v1195
        %v1266 = vrot.slane %v1265, 4
        %v1267 = vadd.f32 %v1265, %v1266
        %v1268 = vrot.slane %v1267, 2
        %v1269 = vadd.f32 %v1267, %v1268
        %v1270 = vrot.slane %v1269, 1
        %v1271 = vadd.f32 %v1269, %v1270
        %v1274 = vcombine.low %v1234, %v1271
        %v1276 = vunpack.c.l.s4 1966171168
        %v1277 = vunpack.c.0.s8 %v1276
        %v1278 = vlaneseq
        %v1279 = vshrl.u32 %v1278, 7
        %v1280 = vsub.s32 %v1277, %v1279
        %v1281 = vrot.slane %v1274, %v1280
        %v1283 = vunpack.c.l.s4 1966171168
        %v1284 = vunpack.c.0.s8 %v1283
        %v1285 = vlaneseq
        %v1286 = vshrl.u32 %v1285, 7
        %v1287 = vsub.s32 %v1284, %v1286
        %v1288 = vrot.slane %v1281, %v1287
        %v1290 = vadd.f32 %v1197, %v1288
        %v1291 = vlaneseq
        %vm1292 = vcmp.ge.s32.totalorder %v1291, 0
        %vm1293 = vcmp.lt.s32.totalorder %v1291, 256
        %vm1294 = vmand %vm1292, %vm1293
        %1295 = vst.msk [vmem:[#allocation4] sm:$0x3] %vm1294, %v1290
        %v1296 = vld [vmem:[#allocation5] sm:$0xff]
        %v1297 = vld [vmem:[#allocation5 + $0x8] sm:$0xff]
        %v1298 = vld [vmem:[#allocation5 + $0x10] sm:$0xff]
        %v1299 = vld [vmem:[#allocation5 + $0x18] sm:$0xff]
        %v1301 = vlaneseq
        %v1302 = vshrl.u32 %v1301, 7
        %v1303 = vsub.s32 0, %v1302
        %v1304 = vrot.slane %v992, %v1303
        %v1305 = vlaneseq
        %v1306 = vshrl.u32 %v1305, 7
        %v1307 = vsub.s32 1, %v1306
        %v1308 = vrot.slane %v992, %v1307
        %v1311 = vmul.f32 %v1304, %v1296
        %v1312 = vmul.f32 %v1308, %v1297
        %v1313 = vmul.f32 %v1304, %v1298
        %v1314 = vmul.f32 %v1308, %v1299
        %v1315 = vpack.c.bf16 %v1073, %v1069
        %v1316 = vpack.c.bf16 %v1075, %v1071
        %v1317 = vpack.c.bf16 %v1081, %v1077
        %v1318 = vpack.c.bf16 %v1083, %v1079
        %v1319 = vpack.c.bf16 %v1089, %v1085
        %v1320 = vpack.c.bf16 %v1091, %v1087
        %v1321 = vpack.c.bf16 %v1097, %v1093
        %v1322 = vpack.c.bf16 %v1099, %v1095
        %v1323 = vpack.c.bf16 %v1105, %v1101
        %v1324 = vpack.c.bf16 %v1107, %v1103
        %v1325 = vpack.c.bf16 %v1113, %v1109
        %v1326 = vpack.c.bf16 %v1115, %v1111
        %v1327 = vpack.c.bf16 %v1121, %v1117
        %v1328 = vpack.c.bf16 %v1123, %v1119
        %v1329 = vpack.c.bf16 %v1129, %v1125
        %v1330 = vpack.c.bf16 %v1131, %v1127
        %v1331 = vpack.c.bf16 %v1137, %v1133
        %v1332 = vpack.c.bf16 %v1139, %v1135
        %v1333 = vpack.c.bf16 %v1145, %v1141
        %v1334 = vpack.c.bf16 %v1147, %v1143
        %v1335 = vpack.c.bf16 %v1153, %v1149
        %v1336 = vpack.c.bf16 %v1155, %v1151
        %v1337 = vpack.c.bf16 %v1161, %v1157
        %v1338 = vpack.c.bf16 %v1163, %v1159
        %v1339 = vpack.c.bf16 %v1169, %v1165
        %v1340 = vpack.c.bf16 %v1171, %v1167
        %v1341 = vpack.c.bf16 %v1177, %v1173
        %v1342 = vpack.c.bf16 %v1179, %v1175
        %v1343 = vpack.c.bf16 %v1185, %v1181
        %v1344 = vpack.c.bf16 %v1187, %v1183
        %v1345 = vpack.c.bf16 %v1193, %v1189
        %v1346 = vpack.c.bf16 %v1195, %v1191
        %1347 = vmatprep.subr.bf16.mxu0 %v1316
        %1348 = vmatpush1.bf16.msra.mxu0 %v1315
        %1349 = vmatprep.subr.bf16.mxu0 %v1318
        %1350 = vmatpush1.bf16.msra.mxu0 %v1317
        %1351 = vmatprep.subr.bf16.mxu0 %v1320
        %1352 = vmatpush1.bf16.msra.mxu0 %v1319
        %1353 = vmatprep.subr.bf16.mxu0 %v1322
        %1354 = vmatpush1.bf16.msra.mxu0 %v1321
        %1355 = vmatprep.subr.bf16.mxu0 %v1324
        %1356 = vmatpush1.bf16.msra.mxu0 %v1323
        %1357 = vmatprep.subr.bf16.mxu0 %v1326
        %1358 = vmatpush1.bf16.msra.mxu0 %v1325
        %1359 = vmatprep.subr.bf16.mxu0 %v1328
        %1360 = vmatpush1.bf16.msra.mxu0 %v1327
        %1361 = vmatprep.subr.bf16.mxu0 %v1330
        %1362 = vmatpush1.bf16.msra.mxu0 %v1329
        %1363 = vmatprep.subr.bf16.mxu0 %v1332
        %1364 = vmatpush1.bf16.msra.mxu0 %v1331
        %1365 = vmatprep.subr.bf16.mxu0 %v1334
        %1366 = vmatpush1.bf16.msra.mxu0 %v1333
        %1367 = vmatprep.subr.bf16.mxu0 %v1336
        %1368 = vmatpush1.bf16.msra.mxu0 %v1335
        %1369 = vmatprep.subr.bf16.mxu0 %v1338
        %1370 = vmatpush1.bf16.msra.mxu0 %v1337
        %1371 = vmatprep.subr.bf16.mxu0 %v1340
        %1372 = vmatpush1.bf16.msra.mxu0 %v1339
        %1373 = vmatprep.subr.bf16.mxu0 %v1342
        %1374 = vmatpush1.bf16.msra.mxu0 %v1341
        %1375 = vmatprep.subr.bf16.mxu0 %v1344
        %1376 = vmatpush1.bf16.msra.mxu0 %v1343
        %1377 = vmatprep.subr.bf16.mxu0 %v1346
        %1378 = vmatpush1.bf16.msra.mxu0 %v1345
        %1379 = vmatprep.mubr.bf16.mxu0 %v608
        %1380 = vmatmul.mubr.bf16.gmra.mrb[0].mxu0 %v607
        %v1381 = vpop.f32.mrb[0].mxu0
        %v1382 = vadd.f32 0.0, %v1381
        %v1383 = vpop.f32.mrb[0].mxu0
        %v1384 = vadd.f32 0.0, %v1383
        %v1385 = vpop.f32.mrb[0].mxu0
        %v1386 = vadd.f32 0.0, %v1385
        %v1387 = vpop.f32.mrb[0].mxu0
        %v1388 = vadd.f32 0.0, %v1387
        %1389 = vdwg.mxu0
        %v1390 = vadd.f32 %v1311, %v1382
        %v1391 = vadd.f32 %v1312, %v1384
        %v1392 = vadd.f32 %v1313, %v1386
        %v1393 = vadd.f32 %v1314, %v1388
        %1394 = vst [vmem:[#allocation5] sm:$0xff] %v1390
        %1395 = vst [vmem:[#allocation5 + $0x8] sm:$0xff] %v1391
        %1396 = vst [vmem:[#allocation5 + $0x10] sm:$0xff] %v1392
        %1397 = vst [vmem:[#allocation5 + $0x18] sm:$0xff] %v1393
        %1398 = vst.msk [vmem:[#allocation3] sm:$0x3] %vm1294, %v989
        // Predicated region
        $region77: #{tpu_custom_call.1} parent=47 // pred_check
          %p1399 = pneg %p425
        $region78: #{tpu_custom_call.1} parent=47 // pred_check_branch
          %1401 = sbr.rel (%p1399) target = $region80
        $region79: #{tpu_custom_call.1} parent=47 // pred_region
          %v1402 = vld [vmem:[#allocation5] sm:$0xff]
          %v1403 = vld [vmem:[#allocation5 + $0x8] sm:$0xff]
          %v1404 = vld [vmem:[#allocation5 + $0x10] sm:$0xff]
          %v1405 = vld [vmem:[#allocation5 + $0x18] sm:$0xff]
          %v1406 = vld [vmem:[#allocation4] sm:$0x3]
          %v1408 = vlaneseq
          %v1409 = vshrl.u32 %v1408, 7
          %v1410 = vsub.s32 0, %v1409
          %v1411 = vrot.slane %v1406, %v1410
          %v1412 = vlaneseq
          %v1413 = vshrl.u32 %v1412, 7
          %v1414 = vsub.s32 1, %v1413
          %v1415 = vrot.slane %v1406, %v1414
          %v1418 = vrcp.pop %v1411
          %v1419 = vmul.f32 %v1402, %v1418
          %v1420 = vrcp.pop %v1415
          %v1421 = vmul.f32 %v1403, %v1420
          %v1422 = vmul.f32 %v1404, %v1418
          %v1423 = vmul.f32 %v1405, %v1420
          %s1424 = sld [smem:[#allocation6]]
          %v1425 = vstv %s1424
          %v1426 = vmul.f32 %v1425, %v1419
          %v1427 = vmul.f32 %v1425, %v1421
          %v1428 = vmul.f32 %v1425, %v1422
          %v1429 = vmul.f32 %v1425, %v1423
          %v1430 = vld [vmem:[%s360] sm:$0xff]
          %v1431 = vld [vmem:[%s360 + $0x8] sm:$0xff]
          %v1432 = vld [vmem:[%s360 + $0x10] sm:$0xff]
          %v1433 = vld [vmem:[%s360 + $0x18] sm:$0xff]
          %v1434 = vadd.f32 %v1426, %v1430
          %v1435 = vadd.f32 %v1427, %v1431
          %v1436 = vadd.f32 %v1428, %v1432
          %v1437 = vadd.f32 %v1429, %v1433
          %1438 = vst [vmem:[%s420] sm:$0xff] %v1434
          %1439 = vst [vmem:[%s420 + $0x8] sm:$0xff] %v1435
          %1440 = vst [vmem:[%s420 + $0x10] sm:$0xff] %v1436
          %1441 = vst [vmem:[%s420 + $0x18] sm:$0xff] %v1437
        $region80: #{tpu_custom_call.1} parent=47 // pred_fallthru
          _
        %s1442 = sand.u32 %s220, 1
        %s1443 = scalar_lea.sflag [#allocation9], %s1442
        %s1444 = sand.u32 %s220, 1
        %s1445 = smul.addr %s1444, 32
        %s1446 = scalar_lea.vmem [#allocation18], %s1445
        // Predicated region
        $region81: #{tpu_custom_call.1} parent=47 // pred_check
          %p1447 = pneg %p230
        $region82: #{tpu_custom_call.1} parent=47 // pred_check_branch
          %1449 = sbr.rel (%p1447) target = $region84
        $region83: #{tpu_custom_call.1} parent=47 // pred_region
          %s1450 = smul.u32 2, %s36
          %s1452 = ssub.s32 512, 512
          %1453 = vsyncadd %s1443, %s1452
          %s1454 = smul.addr %s35, 4
          %s1455 = sadd.s32 %s1450, %s1454
          %s1456 = smul.addr %s1455, 128
          %s1457 = scalar_lea.hbm %s7, %s1456
          %s1458 = sshll.u32 %s1446, 4
          %s1459 = int_to_ptr.vmem [resolvable:$true] %s1458
          %1464 = dma.vmem_to_hbm [thread:$0]  %s1459, 512, %s1457, %s1443, 256, 256, 16
        $region84: #{tpu_custom_call.1} parent=47 // pred_fallthru
          _
      $region48: #{tpu_custom_call.1} parent=5 // pred_fallthru
        _
      %p1465 = scmp.le.s32.totalorder 2, %s25
      // Predicated region
      $region85: #{tpu_custom_call.1} parent=5 // pred_check
        %p1466 = pneg %p1465
      $region86: #{tpu_custom_call.1} parent=5 // pred_check_branch
        %1468 = sbr.rel (%p1466) target = $region88
      $region87: #{tpu_custom_call.1} parent=5 // pred_region
        %s1469 = ssub.s32 %s25, 2
        // Predicated region
        $region89: #{tpu_custom_call.1} parent=87 // pred_check
          %p1470 = pneg %p236
        $region90: #{tpu_custom_call.1} parent=87 // pred_check_branch
          %1472 = sbr.rel (%p1470) target = $region92
        $region91: #{tpu_custom_call.1} parent=87 // pred_region
          %s1473 = sand.u32 %s221, 1
          %s1474 = scalar_lea.sflag [#allocation9], %s1473
          %s1475 = sand.u32 %s221, 1
          %s1476 = smul.addr %s1475, 32
          %s1477 = scalar_lea.vmem [#allocation18], %s1476
          %1478 = dma.done %s1474, 512
        $region92: #{tpu_custom_call.1} parent=87 // pred_fallthru
          _
      $region88: #{tpu_custom_call.1} parent=5 // pred_fallthru
        _
    $region6: #{tpu_custom_call.1} parent=1 // loop_footer
      %s29 = sadd.s32 1, %s25
    $region7: #{tpu_custom_call.1} parent=1 // loop_footer_branch
      %24 = sbr.rel target = $region3
    $region8: #{tpu_custom_call.1} parent=1 // loop_exit
      _
    %1479 = vsyncpa [#allocation8], 1
    %s1480 = scalar_lea.sflag [#allocation8], 1
    %1481 = vsyncpa %s1480, 1
    %1482 = vsyncpa [#allocation11], 1
    %s1483 = scalar_lea.sflag [#allocation11], 1
    %1484 = vsyncpa %s1483, 1
    %1485 = vsyncpa [#allocation14], 1
    %1486 = vsyncpa [#allocation17], 1
    %1487 = vsyncpa [#allocation9], 1
    %s1488 = scalar_lea.sflag [#allocation9], 1
    %1489 = vsyncpa %s1488, 1

</llo_original>
